<compile_context>
chip_gen: v7x
topology: tpu7x:2x2x1
jax: 0.10.0
libtpu: 0.0.40
codegen_flags: <defaults>
</compile_context>

<pallas_src>
import functools
import numpy as np
import jax
import jax.numpy as jnp
from jax.experimental import pallas as pl
from jax.experimental.pallas import tpu as pltpu

# ---- module hyper-parameters (match the nn.Module defaults) ----
DISCO_FACTOR = 10.0
DATA_SCOPE_MIN = 125.0 - 5
DATA_SCOPE_MAX = 125.0 + 5
CLAMP_MIN = 0.001
CLAMP_MAX = 0.999
BACKGROUND_LABEL = 0.0

LANE = 128
_N_ACC = 8  # Sa, Sb, Sab, Saa, Sbb, Rab, Raa, Rbb


def _extreme_disco_kernel(o_row_ref, t_row_ref, m_row_ref,
                          o_col_ref, t_col_ref, m_col_ref,
                          loss_ref, acc_ref, *, tile):
    pid = pl.program_id(0)
    last = pl.num_programs(0) - 1

    @pl.when(pid == 0)
    def _init():
        for k in range(_N_ACC):
            acc_ref[k] = 0.0

    # ---------------- per row-block O(TILE x B) DisCo partials ----------------
    i0 = pl.multiple_of(pid * tile, 8)
    o_c = o_col_ref[pl.ds(i0, tile), :]          # (T, 1) tile rows
    t_c = t_col_ref[pl.ds(i0, tile), :]
    m_c = m_col_ref[pl.ds(i0, tile), :]
    o_r = o_row_ref[...]                         # (1, B) full rows
    m_r = m_row_ref[...]

    # 0/1 background weights (replaces the boolean masked-select of the ref)
    w_col = (t_col_ref[...] == BACKGROUND_LABEL).astype(jnp.float32)  # (B, 1)
    w_i = (t_c == BACKGROUND_LABEL).astype(jnp.float32)               # (T, 1)

    a = jnp.abs(m_c - m_r)                       # (T, B) |mass_i - mass_j|
    b = jnp.abs(o_c - o_r)                       # (T, B) |out_i  - out_j |

    # Weighted row-sums via the (otherwise idle) MXU, f32 accumulation.
    dot = functools.partial(jnp.dot, preferred_element_type=jnp.float32)
    ra = dot(a, w_col)        # (T, 1)  sum_j w_j a_ij
    rb = dot(b, w_col)        # (T, 1)  sum_j w_j b_ij
    rab = dot(a * b, w_col)   # (T, 1)  sum_j w_j a_ij b_ij
    raa = dot(a * a, w_col)   # (T, 1)  sum_j w_j a_ij^2
    rbb = dot(b * b, w_col)   # (T, 1)  sum_j w_j b_ij^2

    acc_ref[0] += jnp.sum(w_i * ra)          # Sa
    acc_ref[1] += jnp.sum(w_i * rb)          # Sb
    acc_ref[2] += jnp.sum(w_i * rab)         # Sab
    acc_ref[3] += jnp.sum(w_i * raa)         # Saa
    acc_ref[4] += jnp.sum(w_i * rbb)         # Sbb
    acc_ref[5] += jnp.sum(w_i * ra * rb)     # Rab
    acc_ref[6] += jnp.sum(w_i * ra * ra)     # Raa
    acc_ref[7] += jnp.sum(w_i * rb * rb)     # Rbb

    # ---------------- finalize (O(B), runs once at the last step) -------------
    @pl.when(pid == last)
    def _finalize():
        t_r = t_row_ref[...]
        mass_mask = jnp.logical_and(m_r > DATA_SCOPE_MIN,
                                    m_r < DATA_SCOPE_MAX).astype(jnp.float32)
        c = jnp.clip(o_r, CLAMP_MIN, CLAMP_MAX)
        extreme = ((t_r - 1.0) / (c - 1.0)
                   + t_r / c
                   + (2.0 * t_r - 1.0) * jnp.log(1.0 - c)
                   + (1.0 - 2.0 * t_r) * jnp.log(c))
        n_win = jnp.maximum(jnp.sum(mass_mask), 1.0)     # guard: empty window
        extreme_loss = jnp.sum(extreme * mass_mask) / n_win

        w_r = (t_r == BACKGROUND_LABEL).astype(jnp.float32)
        n_bkg = jnp.maximum(jnp.sum(w_r), 1.0)           # guard: no background
        inv_n = 1.0 / n_bkg

        sa, sb = acc_ref[0], acc_ref[1]
        sab, saa, sbb = acc_ref[2], acc_ref[3], acc_ref[4]
        r_ab, r_aa, r_bb = acc_ref[5], acc_ref[6], acc_ref[7]

        # sum_ij w_i w_j A_ij B_ij = Sab - (2/n) Rab + Sa Sb / n^2  (symmetry)
        num_ab = sab - 2.0 * inv_n * r_ab + sa * sb * inv_n * inv_n
        num_aa = saa - 2.0 * inv_n * r_aa + sa * sa * inv_n * inv_n
        num_bb = sbb - 2.0 * inv_n * r_bb + sb * sb * inv_n * inv_n
        # 1/n^2 factors cancel between numerator and denominator.
        denom = jnp.sqrt(jnp.maximum(num_aa * num_bb, 1e-30))
        dcorr = num_ab / denom

        loss_ref[0] = extreme_loss + DISCO_FACTOR * dcorr


def _pick_tile(b_pad, bytes_budget=24 * 1024 * 1024):
    """Largest multiple of 8 dividing b_pad s.t. ~6 (T,B) f32 temps fit budget."""
    cap = max(8, bytes_budget // (6 * 4 * b_pad))
    t = min(b_pad, (cap // 8) * 8)
    t = max(8, t)
    while t > 8 and b_pad % t != 0:
        t -= 8
    return t


def extreme_disco_loss(output, target, mass, *, tile_rows=None):
    """output, target, mass: (B, 1) float32 arrays. Returns scalar loss."""
    output = jnp.asarray(output, jnp.float32).reshape(-1)
    target = jnp.asarray(target, jnp.float32).reshape(-1)
    mass = jnp.asarray(mass, jnp.float32).reshape(-1)
    b = output.shape[0]

    # Pad to lane-aligned batch with inert events: mass outside the window
    # (excluded from the extreme term) and non-background (excluded from DisCo).
    b_pad = ((b + LANE - 1) // LANE) * LANE
    pad = b_pad - b
    if pad:
        output = jnp.concatenate([output, jnp.full((pad,), 0.5, jnp.float32)])
        target = jnp.concatenate([target, jnp.ones((pad,), jnp.float32)])
        mass = jnp.concatenate([mass, jnp.zeros((pad,), jnp.float32)])

    tile = tile_rows if tile_rows is not None else _pick_tile(b_pad)
    assert tile % 8 == 0 and b_pad % tile == 0
    num_tiles = b_pad // tile

    o_row = output.reshape(1, b_pad)
    t_row = target.reshape(1, b_pad)
    m_row = mass.reshape(1, b_pad)
    o_col = output.reshape(b_pad, 1)
    t_col = target.reshape(b_pad, 1)
    m_col = mass.reshape(b_pad, 1)

    row_spec = pl.BlockSpec((1, b_pad), lambda i: (0, 0))
    col_spec = pl.BlockSpec((b_pad, 1), lambda i: (0, 0))

    kernel = functools.partial(_extreme_disco_kernel, tile=tile)
    loss = pl.pallas_call(
        kernel,
        out_shape=jax.ShapeDtypeStruct((1,), jnp.float32),
        grid_spec=pltpu.PrefetchScalarGridSpec(
            num_scalar_prefetch=0,
            grid=(num_tiles,),
            in_specs=[row_spec, row_spec, row_spec,
                      col_spec, col_spec, col_spec],
            out_specs=pl.BlockSpec(memory_space=pltpu.MemorySpace.SMEM),
            scratch_shapes=[pltpu.SMEM((_N_ACC,), jnp.float32)],
        ),
        compiler_params=pltpu.CompilerParams(
            dimension_semantics=("arbitrary",),       # cross-tile accumulation
            vmem_limit_bytes=48 * 1024 * 1024,
        ),
    )(o_row, t_row, m_row, o_col, t_col, m_col)
    return loss[0]


# ------------------------- pure numpy reference -----------------------------
def _np_distance_corr(x, y, w):
    amat = np.abs(x[:, None] - x[None, :])
    bmat = np.abs(y[:, None] - y[None, :])
    amatavg = np.mean(amat * w, axis=1)
    A = amat - amatavg[None, :] - amatavg[:, None] + np.mean(amatavg * w)
    bmatavg = np.mean(bmat * w, axis=1)
    Bm = bmat - bmatavg[None, :] - bmatavg[:, None] + np.mean(bmatavg * w)
    ABavg = np.mean(A * Bm * w, axis=1)
    AAavg = np.mean(A * A * w, axis=1)
    BBavg = np.mean(Bm * Bm * w, axis=1)
    return np.mean(ABavg * w) / np.sqrt(np.mean(AAavg * w) * np.mean(BBavg * w))


def _np_reference(output, target, mass):
    output = np.asarray(output, np.float64).squeeze()
    target = np.asarray(target, np.float64).squeeze()
    mass = np.asarray(mass, np.float64).squeeze()
    win = (mass > DATA_SCOPE_MIN) & (mass < DATA_SCOPE_MAX)
    ow, tw = output[win], target[win]
    c = np.clip(ow, CLAMP_MIN, CLAMP_MAX)
    extreme = ((tw - 1.0) / (c - 1.0) + tw / c
               + (2.0 * tw - 1.0) * np.log(1.0 - c)
               + (1.0 - 2.0 * tw) * np.log(c))
    extreme_loss = extreme.mean()
    bkg = target == BACKGROUND_LABEL
    disco = _np_distance_corr(mass[bkg], output[bkg], np.ones(int(bkg.sum())))
    return extreme_loss + DISCO_FACTOR * disco


def _make_inputs(key, batch):
    k1, k2, k3 = jax.random.split(key, 3)
    output = jax.random.uniform(k1, (batch, 1), jnp.float32, 0.01, 0.99)
    target = (jax.random.uniform(k2, (batch, 1), jnp.float32) > 0.5).astype(jnp.float32)
    mass = jax.random.uniform(k3, (batch, 1), jnp.float32, 115.0, 135.0)
    return output, target, mass


if __name__ == "__main__":
    key = jax.random.PRNGKey(0)

    # --- primary small-shape check (single tile) ---
    B = 128
    output, target, mass = _make_inputs(key, B)
    loss = jax.block_until_ready(extreme_disco_loss(output, target, mass))
    ref = _np_reference(output, target, mass)
    assert np.isfinite(float(loss))
    assert np.allclose(float(loss), ref, rtol=2e-3, atol=2e-3), (float(loss), ref)

    # --- multi-tile path check (exercises the row-block grid + SMEM accum) ---
    B2 = 512
    output2, target2, mass2 = _make_inputs(jax.random.PRNGKey(1), B2)
    loss2 = jax.block_until_ready(
        extreme_disco_loss(output2, target2, mass2, tile_rows=128))
    ref2 = _np_reference(output2, target2, mass2)
    assert np.isfinite(float(loss2))
    assert np.allclose(float(loss2), ref2, rtol=5e-3, atol=5e-3), (float(loss2), ref2)

    print("KERNEL_OK")
</pallas_src>

<mosaic_0001>
module attributes {stable_mosaic.version = 11 : i64} {
  func.func @_extreme_disco_kernel(%arg0: i32, %arg1: memref<1x128xf32, #tpu.memory_space<vmem>>, %arg2: memref<1x128xf32, #tpu.memory_space<vmem>>, %arg3: memref<1x128xf32, #tpu.memory_space<vmem>>, %arg4: memref<128x1xf32, #tpu.memory_space<vmem>>, %arg5: memref<128x1xf32, #tpu.memory_space<vmem>>, %arg6: memref<128x1xf32, #tpu.memory_space<vmem>>, %arg7: memref<1xf32, #tpu.memory_space<smem>>, %arg8: memref<8xf32, #tpu.memory_space<smem>>) attributes {dimension_semantics = [#tpu.dimension_semantics<arbitrary>], iteration_bounds = array<i64: 1>, scalar_prefetch = 0 : i64, scratch_operands = 1 : i64, tpu.core_type = #tpu.core_type<tc>, window_params = [{pipeline_mode = #tpu.pipeline_mode<synchronous>, transform_indices = @transform_0, window_bounds = array<i64: 1, 128>}, {pipeline_mode = #tpu.pipeline_mode<synchronous>, transform_indices = @transform_1, window_bounds = array<i64: 1, 128>}, {pipeline_mode = #tpu.pipeline_mode<synchronous>, transform_indices = @transform_2, window_bounds = array<i64: 1, 128>}, {pipeline_mode = #tpu.pipeline_mode<synchronous>, transform_indices = @transform_3, window_bounds = array<i64: 128, 1>}, {pipeline_mode = #tpu.pipeline_mode<synchronous>, transform_indices = @transform_4, window_bounds = array<i64: 128, 1>}, {pipeline_mode = #tpu.pipeline_mode<synchronous>, transform_indices = @transform_5, window_bounds = array<i64: 128, 1>}, {transform_indices = @transform_6, window_bounds = array<i64: 1>}]} {
    %c0_i32 = arith.constant 0 : i32
    %0 = arith.cmpi eq, %arg0, %c0_i32 : i32
    %1 = arith.extui %0 : i1 to i32
    %c0_i32_0 = arith.constant 0 : i32
    %2 = arith.cmpi ne, %1, %c0_i32_0 : i32
    scf.if %2 {
      %cst_34 = arith.constant 0.000000e+00 : f32
      %c0_35 = arith.constant 0 : index
      %108 = memref.load %arg8[%c0_35] : memref<8xf32, #tpu.memory_space<smem>>
      memref.store %cst_34, %arg8[%c0_35] : memref<8xf32, #tpu.memory_space<smem>>
      %cst_36 = arith.constant 0.000000e+00 : f32
      %c1_37 = arith.constant 1 : index
      %109 = memref.load %arg8[%c1_37] : memref<8xf32, #tpu.memory_space<smem>>
      memref.store %cst_36, %arg8[%c1_37] : memref<8xf32, #tpu.memory_space<smem>>
      %cst_38 = arith.constant 0.000000e+00 : f32
      %c2_39 = arith.constant 2 : index
      %110 = memref.load %arg8[%c2_39] : memref<8xf32, #tpu.memory_space<smem>>
      memref.store %cst_38, %arg8[%c2_39] : memref<8xf32, #tpu.memory_space<smem>>
      %cst_40 = arith.constant 0.000000e+00 : f32
      %c3_41 = arith.constant 3 : index
      %111 = memref.load %arg8[%c3_41] : memref<8xf32, #tpu.memory_space<smem>>
      memref.store %cst_40, %arg8[%c3_41] : memref<8xf32, #tpu.memory_space<smem>>
      %cst_42 = arith.constant 0.000000e+00 : f32
      %c4_43 = arith.constant 4 : index
      %112 = memref.load %arg8[%c4_43] : memref<8xf32, #tpu.memory_space<smem>>
      memref.store %cst_42, %arg8[%c4_43] : memref<8xf32, #tpu.memory_space<smem>>
      %cst_44 = arith.constant 0.000000e+00 : f32
      %c5_45 = arith.constant 5 : index
      %113 = memref.load %arg8[%c5_45] : memref<8xf32, #tpu.memory_space<smem>>
      memref.store %cst_44, %arg8[%c5_45] : memref<8xf32, #tpu.memory_space<smem>>
      %cst_46 = arith.constant 0.000000e+00 : f32
      %c6_47 = arith.constant 6 : index
      %114 = memref.load %arg8[%c6_47] : memref<8xf32, #tpu.memory_space<smem>>
      memref.store %cst_46, %arg8[%c6_47] : memref<8xf32, #tpu.memory_space<smem>>
      %cst_48 = arith.constant 0.000000e+00 : f32
      %c7_49 = arith.constant 7 : index
      %115 = memref.load %arg8[%c7_49] : memref<8xf32, #tpu.memory_space<smem>>
      memref.store %cst_48, %arg8[%c7_49] : memref<8xf32, #tpu.memory_space<smem>>
    } else {
    }
    %c128_i32 = arith.constant 128 : i32
    %3 = arith.muli %arg0, %c128_i32 : i32
    %4 = tpu.assume_multiple %3, 8 : i32
    %5 = arith.index_cast %4 : i32 to index
    %c0 = arith.constant 0 : index
    %6 = vector.load %arg4[%5, %c0] : memref<128x1xf32, #tpu.memory_space<vmem>>, vector<128x1xf32>
    %7 = arith.index_cast %4 : i32 to index
    %c0_1 = arith.constant 0 : index
    %8 = vector.load %arg5[%7, %c0_1] : memref<128x1xf32, #tpu.memory_space<vmem>>, vector<128x1xf32>
    %9 = arith.index_cast %4 : i32 to index
    %c0_2 = arith.constant 0 : index
    %10 = vector.load %arg6[%9, %c0_2] : memref<128x1xf32, #tpu.memory_space<vmem>>, vector<128x1xf32>
    %c0_3 = arith.constant 0 : index
    %c0_4 = arith.constant 0 : index
    %11 = vector.load %arg1[%c0_3, %c0_4] : memref<1x128xf32, #tpu.memory_space<vmem>>, vector<1x128xf32>
    %c0_5 = arith.constant 0 : index
    %c0_6 = arith.constant 0 : index
    %12 = vector.load %arg3[%c0_5, %c0_6] : memref<1x128xf32, #tpu.memory_space<vmem>>, vector<1x128xf32>
    %c0_7 = arith.constant 0 : index
    %c0_8 = arith.constant 0 : index
    %13 = vector.load %arg5[%c0_7, %c0_8] : memref<128x1xf32, #tpu.memory_space<vmem>>, vector<128x1xf32>
    %cst = arith.constant 0.000000e+00 : f32
    %14 = vector.broadcast %cst : f32 to vector<128x1xf32>
    %15 = arith.cmpf oeq, %13, %14 : vector<128x1xf32>
    %16 = arith.extui %15 : vector<128x1xi1> to vector<128x1xi32>
    %17 = arith.sitofp %16 : vector<128x1xi32> to vector<128x1xf32>
    %cst_9 = arith.constant 0.000000e+00 : f32
    %18 = vector.broadcast %cst_9 : f32 to vector<128x1xf32>
    %19 = arith.cmpf oeq, %8, %18 : vector<128x1xf32>
    %20 = arith.extui %19 : vector<128x1xi1> to vector<128x1xi32>
    %21 = arith.sitofp %20 : vector<128x1xi32> to vector<128x1xf32>
    %22 = vector.broadcast %10 : vector<128x1xf32> to vector<128x128xf32>
    %23 = vector.broadcast %12 : vector<1x128xf32> to vector<128x128xf32>
    %24 = arith.subf %22, %23 : vector<128x128xf32>
    %25 = math.absf %24 : vector<128x128xf32>
    %26 = vector.broadcast %6 : vector<128x1xf32> to vector<128x128xf32>
    %27 = vector.broadcast %11 : vector<1x128xf32> to vector<128x128xf32>
    %28 = arith.subf %26, %27 : vector<128x128xf32>
    %29 = math.absf %28 : vector<128x128xf32>
    %cst_10 = arith.constant dense<0.000000e+00> : vector<128x1xf32>
    %30 = tpu.matmul %25, %17, %cst_10 {dimension_numbers = #tpu.dot_dimension_numbers<[1], [0], [0], [1], [0, 0, 1, 1], [], []>} : vector<128x128xf32>, vector<128x1xf32>, vector<128x1xf32> -> vector<128x1xf32>
    %cst_11 = arith.constant dense<0.000000e+00> : vector<128x1xf32>
    %31 = tpu.matmul %29, %17, %cst_11 {dimension_numbers = #tpu.dot_dimension_numbers<[1], [0], [0], [1], [0, 0, 1, 1], [], []>} : vector<128x128xf32>, vector<128x1xf32>, vector<128x1xf32> -> vector<128x1xf32>
    %32 = arith.mulf %25, %29 : vector<128x128xf32>
    %cst_12 = arith.constant dense<0.000000e+00> : vector<128x1xf32>
    %33 = tpu.matmul %32, %17, %cst_12 {dimension_numbers = #tpu.dot_dimension_numbers<[1], [0], [0], [1], [0, 0, 1, 1], [], []>} : vector<128x128xf32>, vector<128x1xf32>, vector<128x1xf32> -> vector<128x1xf32>
    %34 = arith.mulf %25, %25 : vector<128x128xf32>
    %cst_13 = arith.constant dense<0.000000e+00> : vector<128x1xf32>
    %35 = tpu.matmul %34, %17, %cst_13 {dimension_numbers = #tpu.dot_dimension_numbers<[1], [0], [0], [1], [0, 0, 1, 1], [], []>} : vector<128x128xf32>, vector<128x1xf32>, vector<128x1xf32> -> vector<128x1xf32>
    %36 = arith.mulf %29, %29 : vector<128x128xf32>
    %cst_14 = arith.constant dense<0.000000e+00> : vector<128x1xf32>
    %37 = tpu.matmul %36, %17, %cst_14 {dimension_numbers = #tpu.dot_dimension_numbers<[1], [0], [0], [1], [0, 0, 1, 1], [], []>} : vector<128x128xf32>, vector<128x1xf32>, vector<128x1xf32> -> vector<128x1xf32>
    %c0_15 = arith.constant 0 : index
    %38 = memref.load %arg8[%c0_15] : memref<8xf32, #tpu.memory_space<smem>>
    %39 = arith.mulf %21, %30 : vector<128x1xf32>
    %40 = vector.shape_cast %39 : vector<128x1xf32> to vector<1x128x1xf32>
    %cst_16 = arith.constant dense<0.000000e+00> : vector<1xf32>
    %41 = vector.multi_reduction <add>, %40, %cst_16 [1, 2] : vector<1x128x1xf32> to vector<1xf32>
    %42 = vector.shape_cast %41 : vector<1xf32> to vector<1x1x1xf32>
    %43 = vector.extract %42[0, 0, 0] : f32 from vector<1x1x1xf32>
    %44 = arith.addf %38, %43 : f32
    %c0_17 = arith.constant 0 : index
    %45 = memref.load %arg8[%c0_17] : memref<8xf32, #tpu.memory_space<smem>>
    memref.store %44, %arg8[%c0_17] : memref<8xf32, #tpu.memory_space<smem>>
    %c1 = arith.constant 1 : index
    %46 = memref.load %arg8[%c1] : memref<8xf32, #tpu.memory_space<smem>>
    %47 = arith.mulf %21, %31 : vector<128x1xf32>
    %48 = vector.shape_cast %47 : vector<128x1xf32> to vector<1x128x1xf32>
    %cst_18 = arith.constant dense<0.000000e+00> : vector<1xf32>
    %49 = vector.multi_reduction <add>, %48, %cst_18 [1, 2] : vector<1x128x1xf32> to vector<1xf32>
    %50 = vector.shape_cast %49 : vector<1xf32> to vector<1x1x1xf32>
    %51 = vector.extract %50[0, 0, 0] : f32 from vector<1x1x1xf32>
    %52 = arith.addf %46, %51 : f32
    %c1_19 = arith.constant 1 : index
    %53 = memref.load %arg8[%c1_19] : memref<8xf32, #tpu.memory_space<smem>>
    memref.store %52, %arg8[%c1_19] : memref<8xf32, #tpu.memory_space<smem>>
    %c2 = arith.constant 2 : index
    %54 = memref.load %arg8[%c2] : memref<8xf32, #tpu.memory_space<smem>>
    %55 = arith.mulf %21, %33 : vector<128x1xf32>
    %56 = vector.shape_cast %55 : vector<128x1xf32> to vector<1x128x1xf32>
    %cst_20 = arith.constant dense<0.000000e+00> : vector<1xf32>
    %57 = vector.multi_reduction <add>, %56, %cst_20 [1, 2] : vector<1x128x1xf32> to vector<1xf32>
    %58 = vector.shape_cast %57 : vector<1xf32> to vector<1x1x1xf32>
    %59 = vector.extract %58[0, 0, 0] : f32 from vector<1x1x1xf32>
    %60 = arith.addf %54, %59 : f32
    %c2_21 = arith.constant 2 : index
    %61 = memref.load %arg8[%c2_21] : memref<8xf32, #tpu.memory_space<smem>>
    memref.store %60, %arg8[%c2_21] : memref<8xf32, #tpu.memory_space<smem>>
    %c3 = arith.constant 3 : index
    %62 = memref.load %arg8[%c3] : memref<8xf32, #tpu.memory_space<smem>>
    %63 = arith.mulf %21, %35 : vector<128x1xf32>
    %64 = vector.shape_cast %63 : vector<128x1xf32> to vector<1x128x1xf32>
    %cst_22 = arith.constant dense<0.000000e+00> : vector<1xf32>
    %65 = vector.multi_reduction <add>, %64, %cst_22 [1, 2] : vector<1x128x1xf32> to vector<1xf32>
    %66 = vector.shape_cast %65 : vector<1xf32> to vector<1x1x1xf32>
    %67 = vector.extract %66[0, 0, 0] : f32 from vector<1x1x1xf32>
    %68 = arith.addf %62, %67 : f32
    %c3_23 = arith.constant 3 : index
    %69 = memref.load %arg8[%c3_23] : memref<8xf32, #tpu.memory_space<smem>>
    memref.store %68, %arg8[%c3_23] : memref<8xf32, #tpu.memory_space<smem>>
    %c4 = arith.constant 4 : index
    %70 = memref.load %arg8[%c4] : memref<8xf32, #tpu.memory_space<smem>>
    %71 = arith.mulf %21, %37 : vector<128x1xf32>
    %72 = vector.shape_cast %71 : vector<128x1xf32> to vector<1x128x1xf32>
    %cst_24 = arith.constant dense<0.000000e+00> : vector<1xf32>
    %73 = vector.multi_reduction <add>, %72, %cst_24 [1, 2] : vector<1x128x1xf32> to vector<1xf32>
    %74 = vector.shape_cast %73 : vector<1xf32> to vector<1x1x1xf32>
    %75 = vector.extract %74[0, 0, 0] : f32 from vector<1x1x1xf32>
    %76 = arith.addf %70, %75 : f32
    %c4_25 = arith.constant 4 : index
    %77 = memref.load %arg8[%c4_25] : memref<8xf32, #tpu.memory_space<smem>>
    memref.store %76, %arg8[%c4_25] : memref<8xf32, #tpu.memory_space<smem>>
    %c5 = arith.constant 5 : index
    %78 = memref.load %arg8[%c5] : memref<8xf32, #tpu.memory_space<smem>>
    %79 = arith.mulf %21, %30 : vector<128x1xf32>
    %80 = arith.mulf %79, %31 : vector<128x1xf32>
    %81 = vector.shape_cast %80 : vector<128x1xf32> to vector<1x128x1xf32>
    %cst_26 = arith.constant dense<0.000000e+00> : vector<1xf32>
    %82 = vector.multi_reduction <add>, %81, %cst_26 [1, 2] : vector<1x128x1xf32> to vector<1xf32>
    %83 = vector.shape_cast %82 : vector<1xf32> to vector<1x1x1xf32>
    %84 = vector.extract %83[0, 0, 0] : f32 from vector<1x1x1xf32>
    %85 = arith.addf %78, %84 : f32
    %c5_27 = arith.constant 5 : index
    %86 = memref.load %arg8[%c5_27] : memref<8xf32, #tpu.memory_space<smem>>
    memref.store %85, %arg8[%c5_27] : memref<8xf32, #tpu.memory_space<smem>>
    %c6 = arith.constant 6 : index
    %87 = memref.load %arg8[%c6] : memref<8xf32, #tpu.memory_space<smem>>
    %88 = arith.mulf %21, %30 : vector<128x1xf32>
    %89 = arith.mulf %88, %30 : vector<128x1xf32>
    %90 = vector.shape_cast %89 : vector<128x1xf32> to vector<1x128x1xf32>
    %cst_28 = arith.constant dense<0.000000e+00> : vector<1xf32>
    %91 = vector.multi_reduction <add>, %90, %cst_28 [1, 2] : vector<1x128x1xf32> to vector<1xf32>
    %92 = vector.shape_cast %91 : vector<1xf32> to vector<1x1x1xf32>
    %93 = vector.extract %92[0, 0, 0] : f32 from vector<1x1x1xf32>
    %94 = arith.addf %87, %93 : f32
    %c6_29 = arith.constant 6 : index
    %95 = memref.load %arg8[%c6_29] : memref<8xf32, #tpu.memory_space<smem>>
    memref.store %94, %arg8[%c6_29] : memref<8xf32, #tpu.memory_space<smem>>
    %c7 = arith.constant 7 : index
    %96 = memref.load %arg8[%c7] : memref<8xf32, #tpu.memory_space<smem>>
    %97 = arith.mulf %21, %31 : vector<128x1xf32>
    %98 = arith.mulf %97, %31 : vector<128x1xf32>
    %99 = vector.shape_cast %98 : vector<128x1xf32> to vector<1x128x1xf32>
    %cst_30 = arith.constant dense<0.000000e+00> : vector<1xf32>
    %100 = vector.multi_reduction <add>, %99, %cst_30 [1, 2] : vector<1x128x1xf32> to vector<1xf32>
    %101 = vector.shape_cast %100 : vector<1xf32> to vector<1x1x1xf32>
    %102 = vector.extract %101[0, 0, 0] : f32 from vector<1x1x1xf32>
    %103 = arith.addf %96, %102 : f32
    %c7_31 = arith.constant 7 : index
    %104 = memref.load %arg8[%c7_31] : memref<8xf32, #tpu.memory_space<smem>>
    memref.store %103, %arg8[%c7_31] : memref<8xf32, #tpu.memory_space<smem>>
    %c0_i32_32 = arith.constant 0 : i32
    %105 = arith.cmpi eq, %arg0, %c0_i32_32 : i32
    %106 = arith.extui %105 : i1 to i32
    %c0_i32_33 = arith.constant 0 : i32
    %107 = arith.cmpi ne, %106, %c0_i32_33 : i32
    scf.if %107 {
      %c0_34 = arith.constant 0 : index
      %c0_35 = arith.constant 0 : index
      %108 = vector.load %arg2[%c0_34, %c0_35] : memref<1x128xf32, #tpu.memory_space<vmem>>, vector<1x128xf32>
      %cst_36 = arith.constant 1.200000e+02 : f32
      %109 = vector.broadcast %cst_36 : f32 to vector<1x128xf32>
      %110 = arith.cmpf ogt, %12, %109 : vector<1x128xf32>
      %cst_37 = arith.constant 1.300000e+02 : f32
      %111 = vector.broadcast %cst_37 : f32 to vector<1x128xf32>
      %112 = arith.cmpf olt, %12, %111 : vector<1x128xf32>
      %113 = arith.andi %110, %112 : vector<1x128xi1>
      %114 = arith.extui %113 : vector<1x128xi1> to vector<1x128xi32>
      %115 = arith.sitofp %114 : vector<1x128xi32> to vector<1x128xf32>
      %cst_38 = arith.constant 1.000000e-03 : f32
      %cst_39 = arith.constant 9.990000e-01 : f32
      %116 = vector.broadcast %cst_38 : f32 to vector<1x128xf32>
      %117 = arith.maximumf %116, %11 : vector<1x128xf32>
      %118 = vector.broadcast %cst_39 : f32 to vector<1x128xf32>
      %119 = arith.minimumf %118, %117 : vector<1x128xf32>
      %cst_40 = arith.constant 1.000000e+00 : f32
      %120 = vector.broadcast %cst_40 : f32 to vector<1x128xf32>
      %121 = arith.subf %108, %120 : vector<1x128xf32>
      %cst_41 = arith.constant 1.000000e+00 : f32
      %122 = vector.broadcast %cst_41 : f32 to vector<1x128xf32>
      %123 = arith.subf %119, %122 : vector<1x128xf32>
      %124 = arith.divf %121, %123 : vector<1x128xf32>
      %125 = arith.divf %108, %119 : vector<1x128xf32>
      %126 = arith.addf %124, %125 : vector<1x128xf32>
      %cst_42 = arith.constant 2.000000e+00 : f32
      %127 = vector.broadcast %cst_42 : f32 to vector<1x128xf32>
      %128 = arith.mulf %127, %108 : vector<1x128xf32>
      %cst_43 = arith.constant 1.000000e+00 : f32
      %129 = vector.broadcast %cst_43 : f32 to vector<1x128xf32>
      %130 = arith.subf %128, %129 : vector<1x128xf32>
      %cst_44 = arith.constant 1.000000e+00 : f32
      %131 = vector.broadcast %cst_44 : f32 to vector<1x128xf32>
      %132 = arith.subf %131, %119 : vector<1x128xf32>
      %133 = math.log %132 : vector<1x128xf32>
      %134 = arith.mulf %130, %133 : vector<1x128xf32>
      %135 = arith.addf %126, %134 : vector<1x128xf32>
      %cst_45 = arith.constant 2.000000e+00 : f32
      %136 = vector.broadcast %cst_45 : f32 to vector<1x128xf32>
      %137 = arith.mulf %136, %108 : vector<1x128xf32>
      %cst_46 = arith.constant 1.000000e+00 : f32
      %138 = vector.broadcast %cst_46 : f32 to vector<1x128xf32>
      %139 = arith.subf %138, %137 : vector<1x128xf32>
      %140 = math.log %119 : vector<1x128xf32>
      %141 = arith.mulf %139, %140 : vector<1x128xf32>
      %142 = arith.addf %135, %141 : vector<1x128xf32>
      %143 = vector.shape_cast %115 : vector<1x128xf32> to vector<1x1x128xf32>
      %cst_47 = arith.constant dense<0.000000e+00> : vector<1xf32>
      %144 = vector.multi_reduction <add>, %143, %cst_47 [1, 2] : vector<1x1x128xf32> to vector<1xf32>
      %145 = vector.shape_cast %144 : vector<1xf32> to vector<1x1x1xf32>
      %146 = vector.extract %145[0, 0, 0] : f32 from vector<1x1x1xf32>
      %cst_48 = arith.constant 1.000000e+00 : f32
      %147 = arith.maximumf %146, %cst_48 : f32
      %148 = arith.mulf %142, %115 : vector<1x128xf32>
      %149 = vector.shape_cast %148 : vector<1x128xf32> to vector<1x1x128xf32>
      %cst_49 = arith.constant dense<0.000000e+00> : vector<1xf32>
      %150 = vector.multi_reduction <add>, %149, %cst_49 [1, 2] : vector<1x1x128xf32> to vector<1xf32>
      %151 = vector.shape_cast %150 : vector<1xf32> to vector<1x1x1xf32>
      %152 = vector.extract %151[0, 0, 0] : f32 from vector<1x1x1xf32>
      %153 = arith.divf %152, %147 : f32
      %cst_50 = arith.constant 0.000000e+00 : f32
      %154 = vector.broadcast %cst_50 : f32 to vector<1x128xf32>
      %155 = arith.cmpf oeq, %108, %154 : vector<1x128xf32>
      %156 = arith.extui %155 : vector<1x128xi1> to vector<1x128xi32>
      %157 = arith.sitofp %156 : vector<1x128xi32> to vector<1x128xf32>
      %158 = vector.shape_cast %157 : vector<1x128xf32> to vector<1x1x128xf32>
      %cst_51 = arith.constant dense<0.000000e+00> : vector<1xf32>
      %159 = vector.multi_reduction <add>, %158, %cst_51 [1, 2] : vector<1x1x128xf32> to vector<1xf32>
      %160 = vector.shape_cast %159 : vector<1xf32> to vector<1x1x1xf32>
      %161 = vector.extract %160[0, 0, 0] : f32 from vector<1x1x1xf32>
      %cst_52 = arith.constant 1.000000e+00 : f32
      %162 = arith.maximumf %161, %cst_52 : f32
      %cst_53 = arith.constant 1.000000e+00 : f32
      %163 = arith.divf %cst_53, %162 : f32
      %c0_54 = arith.constant 0 : index
      %164 = memref.load %arg8[%c0_54] : memref<8xf32, #tpu.memory_space<smem>>
      %c1_55 = arith.constant 1 : index
      %165 = memref.load %arg8[%c1_55] : memref<8xf32, #tpu.memory_space<smem>>
      %c2_56 = arith.constant 2 : index
      %166 = memref.load %arg8[%c2_56] : memref<8xf32, #tpu.memory_space<smem>>
      %c3_57 = arith.constant 3 : index
      %167 = memref.load %arg8[%c3_57] : memref<8xf32, #tpu.memory_space<smem>>
      %c4_58 = arith.constant 4 : index
      %168 = memref.load %arg8[%c4_58] : memref<8xf32, #tpu.memory_space<smem>>
      %c5_59 = arith.constant 5 : index
      %169 = memref.load %arg8[%c5_59] : memref<8xf32, #tpu.memory_space<smem>>
      %c6_60 = arith.constant 6 : index
      %170 = memref.load %arg8[%c6_60] : memref<8xf32, #tpu.memory_space<smem>>
      %c7_61 = arith.constant 7 : index
      %171 = memref.load %arg8[%c7_61] : memref<8xf32, #tpu.memory_space<smem>>
      %cst_62 = arith.constant 2.000000e+00 : f32
      %172 = arith.mulf %cst_62, %163 : f32
      %173 = arith.mulf %172, %169 : f32
      %174 = arith.subf %166, %173 : f32
      %175 = arith.mulf %164, %165 : f32
      %176 = arith.mulf %175, %163 : f32
      %177 = arith.mulf %176, %163 : f32
      %178 = arith.addf %174, %177 : f32
      %cst_63 = arith.constant 2.000000e+00 : f32
      %179 = arith.mulf %cst_63, %163 : f32
      %180 = arith.mulf %179, %170 : f32
      %181 = arith.subf %167, %180 : f32
      %182 = arith.mulf %164, %164 : f32
      %183 = arith.mulf %182, %163 : f32
      %184 = arith.mulf %183, %163 : f32
      %185 = arith.addf %181, %184 : f32
      %cst_64 = arith.constant 2.000000e+00 : f32
      %186 = arith.mulf %cst_64, %163 : f32
      %187 = arith.mulf %186, %171 : f32
      %188 = arith.subf %168, %187 : f32
      %189 = arith.mulf %165, %165 : f32
      %190 = arith.mulf %189, %163 : f32
      %191 = arith.mulf %190, %163 : f32
      %192 = arith.addf %188, %191 : f32
      %193 = arith.mulf %185, %192 : f32
      %cst_65 = arith.constant 1.000000e-30 : f32
      %194 = arith.maximumf %193, %cst_65 : f32
      %195 = math.sqrt %194 : f32
      %196 = arith.divf %178, %195 : f32
      %cst_66 = arith.constant 1.000000e+01 : f32
      %197 = arith.mulf %cst_66, %196 : f32
      %198 = arith.addf %153, %197 : f32
      %c0_67 = arith.constant 0 : index
      %199 = memref.load %arg7[%c0_67] : memref<1xf32, #tpu.memory_space<smem>>
      memref.store %198, %arg7[%c0_67] : memref<1xf32, #tpu.memory_space<smem>>
    } else {
    }
    return
  }
  func.func @transform_0(%arg0: i32) -> (i32, i32) {
    %c0_i32 = arith.constant 0 : i32
    %c0_i32_0 = arith.constant 0 : i32
    %c0_i32_1 = arith.constant 0 : i32
    return %c0_i32, %c0_i32_0 : i32, i32
  }
  func.func @transform_1(%arg0: i32) -> (i32, i32) {
    %c0_i32 = arith.constant 0 : i32
    %c0_i32_0 = arith.constant 0 : i32
    %c0_i32_1 = arith.constant 0 : i32
    return %c0_i32, %c0_i32_0 : i32, i32
  }
  func.func @transform_2(%arg0: i32) -> (i32, i32) {
    %c0_i32 = arith.constant 0 : i32
    %c0_i32_0 = arith.constant 0 : i32
    %c0_i32_1 = arith.constant 0 : i32
    return %c0_i32, %c0_i32_0 : i32, i32
  }
  func.func @transform_3(%arg0: i32) -> (i32, i32) {
    %c0_i32 = arith.constant 0 : i32
    %c0_i32_0 = arith.constant 0 : i32
    %c0_i32_1 = arith.constant 0 : i32
    return %c0_i32, %c0_i32_0 : i32, i32
  }
  func.func @transform_4(%arg0: i32) -> (i32, i32) {
    %c0_i32 = arith.constant 0 : i32
    %c0_i32_0 = arith.constant 0 : i32
    %c0_i32_1 = arith.constant 0 : i32
    return %c0_i32, %c0_i32_0 : i32, i32
  }
  func.func @transform_5(%arg0: i32) -> (i32, i32) {
    %c0_i32 = arith.constant 0 : i32
    %c0_i32_0 = arith.constant 0 : i32
    %c0_i32_1 = arith.constant 0 : i32
    return %c0_i32, %c0_i32_0 : i32, i32
  }
  func.func @transform_6(%arg0: i32) -> i32 {
    %c0_i32 = arith.constant 0 : i32
    %c0_i32_0 = arith.constant 0 : i32
    return %c0_i32 : i32
  }
}

</mosaic_0001>

<llo_original>
// kernel: tpu_custom_call.1
$region0: #{tpu_custom_call.1}
  #allocation0 [shape = 'u32[]', space=smem, size = 0x4, offset = 0x4, fixed_abs, tag = 'smem constant byte address 0x4 - core index']
  #allocation1 [shape = 'u32[144,128]{1,0:T(1,128)}', space=vmem, size = 0x12000, scoped, tag = 'internal scratch']
  #allocation2 [shape = 'f32[8]{0:T(128)}', space=smem, size = 0x200, scoped, tag = 'scratch operand']
  %s0 = inlined_call_operand.vmem [shape: f32[1,128], index: 0, kind: input, shape index: {}]
  %s1 = inlined_call_operand.vmem [shape: f32[1,128], index: 1, kind: input, shape index: {}]
  %s2 = inlined_call_operand.vmem [shape: f32[1,128], index: 2, kind: input, shape index: {}]
  %s3 = inlined_call_operand.vmem [shape: f32[128,1], index: 3, kind: input, shape index: {}]
  %s4 = inlined_call_operand.vmem [shape: f32[128,1], index: 4, kind: input, shape index: {}]
  %s5 = inlined_call_operand.vmem [shape: f32[128,1], index: 5, kind: input, shape index: {}]
  %s6 = inlined_call_operand.hbm [shape: f32[1], index: 6, kind: output, shape index: {}]
  %s7 = sld [smem:[#allocation0]]
  $region42: #{tpu_custom_call.1} parent=0
    _
  %s9 = ssub.s32 1, %s7
  %s10 = scalar_select 0, %s9, %s7
  $region1: #{tpu_custom_call.1} parent=0
    #allocation3 [shape = 'u8[512]{0}', space=smem, size = 0x200, scoped, tag = 'output window, operand 0, single buffered']
    #allocation4 [shape = 's32[1]{0}', space=sflag, size = 0x4, scoped, tag = 'scoped memory for tpu_custom_call.1']
    %11 = vsyncpa [#allocation4], 0
    // Predicated region
    $region2: #{tpu_custom_call.1} parent=1 // pred_check
      _
    $region3: #{tpu_custom_call.1} parent=1 // pred_check_branch
      %13 = sbr.rel (0) target = $region5
    $region4: #{tpu_custom_call.1} parent=1 // pred_region
      _
    $region5: #{tpu_custom_call.1} parent=1 // pred_fallthru
      _
    // Predicated region
    $region6: #{tpu_custom_call.1} parent=1 // pred_check
      _
    $region7: #{tpu_custom_call.1} parent=1 // pred_check_branch
      %15 = sbr.rel (0) target = $region9
    $region8: #{tpu_custom_call.1} parent=1 // pred_region
      _
    $region9: #{tpu_custom_call.1} parent=1 // pred_fallthru
      _
    // Predicated region
    $region10: #{tpu_custom_call.1} parent=1 // pred_check
      _
    $region11: #{tpu_custom_call.1} parent=1 // pred_check_branch
      %17 = sbr.rel (0) target = $region13
    $region12: #{tpu_custom_call.1} parent=1 // pred_region
      _
    $region13: #{tpu_custom_call.1} parent=1 // pred_fallthru
      _
    // Predicated region
    $region14: #{tpu_custom_call.1} parent=1 // pred_check
      _
    $region15: #{tpu_custom_call.1} parent=1 // pred_check_branch
      %19 = sbr.rel (0) target = $region17
    $region16: #{tpu_custom_call.1} parent=1 // pred_region
      _
    $region17: #{tpu_custom_call.1} parent=1 // pred_fallthru
      _
    // Predicated region
    $region18: #{tpu_custom_call.1} parent=1 // pred_check
      _
    $region19: #{tpu_custom_call.1} parent=1 // pred_check_branch
      %21 = sbr.rel (0) target = $region21
    $region20: #{tpu_custom_call.1} parent=1 // pred_region
      _
    $region21: #{tpu_custom_call.1} parent=1 // pred_fallthru
      _
    // Predicated region
    $region22: #{tpu_custom_call.1} parent=1 // pred_check
      _
    $region23: #{tpu_custom_call.1} parent=1 // pred_check_branch
      %23 = sbr.rel (0) target = $region25
    $region24: #{tpu_custom_call.1} parent=1 // pred_region
      _
    $region25: #{tpu_custom_call.1} parent=1 // pred_fallthru
      _
    %p24 = scmp.eq.s32.totalorder 0, 0
    // Predicated region
    $region26: #{tpu_custom_call.1} parent=1 // pred_check
      %p25 = pneg %p24
    $region27: #{tpu_custom_call.1} parent=1 // pred_check_branch
      %27 = sbr.rel (%p25) target = $region29
    $region28: #{tpu_custom_call.1} parent=1 // pred_region
      %s28 = scalar_lea.smem [#allocation2], 0
      %29 = sst [smem:[%s28]] 0.0
      %s30 = scalar_lea.smem [#allocation2], 1
      %31 = sst [smem:[%s30]] 0.0
      %s32 = scalar_lea.smem [#allocation2], 2
      %33 = sst [smem:[%s32]] 0.0
      %s34 = scalar_lea.smem [#allocation2], 3
      %35 = sst [smem:[%s34]] 0.0
      %s36 = scalar_lea.smem [#allocation2], 4
      %37 = sst [smem:[%s36]] 0.0
      %s38 = scalar_lea.smem [#allocation2], 5
      %39 = sst [smem:[%s38]] 0.0
      %s40 = scalar_lea.smem [#allocation2], 6
      %41 = sst [smem:[%s40]] 0.0
      %s42 = scalar_lea.smem [#allocation2], 7
      %43 = sst [smem:[%s42]] 0.0
    $region29: #{tpu_custom_call.1} parent=1 // pred_fallthru
      _
    %s44 = smul.u32 0, 128
    %s45 = scalar_lea.vmem %s3, %s44
    %v46 = vld [vmem:[%s45] sm:$0xff]
    %v47 = vld [vmem:[%s45 + $0x8] sm:$0xff]
    %v48 = vld [vmem:[%s45 + $0x10] sm:$0xff]
    %v49 = vld [vmem:[%s45 + $0x18] sm:$0xff]
    %v50 = vld [vmem:[%s45 + $0x20] sm:$0xff]
    %v51 = vld [vmem:[%s45 + $0x28] sm:$0xff]
    %v52 = vld [vmem:[%s45 + $0x30] sm:$0xff]
    %v53 = vld [vmem:[%s45 + $0x38] sm:$0xff]
    %v54 = vld [vmem:[%s45 + $0x40] sm:$0xff]
    %v55 = vld [vmem:[%s45 + $0x48] sm:$0xff]
    %v56 = vld [vmem:[%s45 + $0x50] sm:$0xff]
    %v57 = vld [vmem:[%s45 + $0x58] sm:$0xff]
    %v58 = vld [vmem:[%s45 + $0x60] sm:$0xff]
    %v59 = vld [vmem:[%s45 + $0x68] sm:$0xff]
    %v60 = vld [vmem:[%s45 + $0x70] sm:$0xff]
    %v61 = vld [vmem:[%s45 + $0x78] sm:$0xff]
    %s62 = scalar_lea.vmem %s4, %s44
    %v63 = vld [vmem:[%s62] sm:$0xff]
    %v64 = vld [vmem:[%s62 + $0x8] sm:$0xff]
    %v65 = vld [vmem:[%s62 + $0x10] sm:$0xff]
    %v66 = vld [vmem:[%s62 + $0x18] sm:$0xff]
    %v67 = vld [vmem:[%s62 + $0x20] sm:$0xff]
    %v68 = vld [vmem:[%s62 + $0x28] sm:$0xff]
    %v69 = vld [vmem:[%s62 + $0x30] sm:$0xff]
    %v70 = vld [vmem:[%s62 + $0x38] sm:$0xff]
    %v71 = vld [vmem:[%s62 + $0x40] sm:$0xff]
    %v72 = vld [vmem:[%s62 + $0x48] sm:$0xff]
    %v73 = vld [vmem:[%s62 + $0x50] sm:$0xff]
    %v74 = vld [vmem:[%s62 + $0x58] sm:$0xff]
    %v75 = vld [vmem:[%s62 + $0x60] sm:$0xff]
    %v76 = vld [vmem:[%s62 + $0x68] sm:$0xff]
    %v77 = vld [vmem:[%s62 + $0x70] sm:$0xff]
    %v78 = vld [vmem:[%s62 + $0x78] sm:$0xff]
    %s79 = scalar_lea.vmem %s5, %s44
    %v80 = vld [vmem:[%s79] sm:$0xff]
    %v81 = vld [vmem:[%s79 + $0x8] sm:$0xff]
    %v82 = vld [vmem:[%s79 + $0x10] sm:$0xff]
    %v83 = vld [vmem:[%s79 + $0x18] sm:$0xff]
    %v84 = vld [vmem:[%s79 + $0x20] sm:$0xff]
    %v85 = vld [vmem:[%s79 + $0x28] sm:$0xff]
    %v86 = vld [vmem:[%s79 + $0x30] sm:$0xff]
    %v87 = vld [vmem:[%s79 + $0x38] sm:$0xff]
    %v88 = vld [vmem:[%s79 + $0x40] sm:$0xff]
    %v89 = vld [vmem:[%s79 + $0x48] sm:$0xff]
    %v90 = vld [vmem:[%s79 + $0x50] sm:$0xff]
    %v91 = vld [vmem:[%s79 + $0x58] sm:$0xff]
    %v92 = vld [vmem:[%s79 + $0x60] sm:$0xff]
    %v93 = vld [vmem:[%s79 + $0x68] sm:$0xff]
    %v94 = vld [vmem:[%s79 + $0x70] sm:$0xff]
    %v95 = vld [vmem:[%s79 + $0x78] sm:$0xff]
    %v96 = vld [vmem:[%s0] sm:$0x1]
    %v97 = vld [vmem:[%s2] sm:$0x1]
    %v98 = vld [vmem:[%s4] sm:$0xff]
    %v99 = vld [vmem:[%s4 + $0x8] sm:$0xff]
    %v100 = vld [vmem:[%s4 + $0x10] sm:$0xff]
    %v101 = vld [vmem:[%s4 + $0x18] sm:$0xff]
    %v102 = vld [vmem:[%s4 + $0x20] sm:$0xff]
    %v103 = vld [vmem:[%s4 + $0x28] sm:$0xff]
    %v104 = vld [vmem:[%s4 + $0x30] sm:$0xff]
    %v105 = vld [vmem:[%s4 + $0x38] sm:$0xff]
    %v106 = vld [vmem:[%s4 + $0x40] sm:$0xff]
    %v107 = vld [vmem:[%s4 + $0x48] sm:$0xff]
    %v108 = vld [vmem:[%s4 + $0x50] sm:$0xff]
    %v109 = vld [vmem:[%s4 + $0x58] sm:$0xff]
    %v110 = vld [vmem:[%s4 + $0x60] sm:$0xff]
    %v111 = vld [vmem:[%s4 + $0x68] sm:$0xff]
    %v112 = vld [vmem:[%s4 + $0x70] sm:$0xff]
    %v113 = vld [vmem:[%s4 + $0x78] sm:$0xff]
    %vm114 = vcmp.eq.f32.partialorder %v98, 0.0
    %vm115 = vcmp.eq.f32.partialorder %v99, 0.0
    %vm116 = vcmp.eq.f32.partialorder %v100, 0.0
    %vm117 = vcmp.eq.f32.partialorder %v101, 0.0
    %vm118 = vcmp.eq.f32.partialorder %v102, 0.0
    %vm119 = vcmp.eq.f32.partialorder %v103, 0.0
    %vm120 = vcmp.eq.f32.partialorder %v104, 0.0
    %vm121 = vcmp.eq.f32.partialorder %v105, 0.0
    %vm122 = vcmp.eq.f32.partialorder %v106, 0.0
    %vm123 = vcmp.eq.f32.partialorder %v107, 0.0
    %vm124 = vcmp.eq.f32.partialorder %v108, 0.0
    %vm125 = vcmp.eq.f32.partialorder %v109, 0.0
    %vm126 = vcmp.eq.f32.partialorder %v110, 0.0
    %vm127 = vcmp.eq.f32.partialorder %v111, 0.0
    %vm128 = vcmp.eq.f32.partialorder %v112, 0.0
    %vm129 = vcmp.eq.f32.partialorder %v113, 0.0
    %v130 = vsel %vm114, 1, 0
    %v131 = vsel %vm115, 1, 0
    %v132 = vsel %vm116, 1, 0
    %v133 = vsel %vm117, 1, 0
    %v134 = vsel %vm118, 1, 0
    %v135 = vsel %vm119, 1, 0
    %v136 = vsel %vm120, 1, 0
    %v137 = vsel %vm121, 1, 0
    %v138 = vsel %vm122, 1, 0
    %v139 = vsel %vm123, 1, 0
    %v140 = vsel %vm124, 1, 0
    %v141 = vsel %vm125, 1, 0
    %v142 = vsel %vm126, 1, 0
    %v143 = vsel %vm127, 1, 0
    %v144 = vsel %vm128, 1, 0
    %v145 = vsel %vm129, 1, 0
    %v146 = vcvt.s32.f32 %v130
    %v147 = vcvt.s32.f32 %v131
    %v148 = vcvt.s32.f32 %v132
    %v149 = vcvt.s32.f32 %v133
    %v150 = vcvt.s32.f32 %v134
    %v151 = vcvt.s32.f32 %v135
    %v152 = vcvt.s32.f32 %v136
    %v153 = vcvt.s32.f32 %v137
    %v154 = vcvt.s32.f32 %v138
    %v155 = vcvt.s32.f32 %v139
    %v156 = vcvt.s32.f32 %v140
    %v157 = vcvt.s32.f32 %v141
    %v158 = vcvt.s32.f32 %v142
    %v159 = vcvt.s32.f32 %v143
    %v160 = vcvt.s32.f32 %v144
    %v161 = vcvt.s32.f32 %v145
    %vm162 = vcmp.eq.f32.partialorder %v63, 0.0
    %vm163 = vcmp.eq.f32.partialorder %v64, 0.0
    %vm164 = vcmp.eq.f32.partialorder %v65, 0.0
    %vm165 = vcmp.eq.f32.partialorder %v66, 0.0
    %vm166 = vcmp.eq.f32.partialorder %v67, 0.0
    %vm167 = vcmp.eq.f32.partialorder %v68, 0.0
    %vm168 = vcmp.eq.f32.partialorder %v69, 0.0
    %vm169 = vcmp.eq.f32.partialorder %v70, 0.0
    %vm170 = vcmp.eq.f32.partialorder %v71, 0.0
    %vm171 = vcmp.eq.f32.partialorder %v72, 0.0
    %vm172 = vcmp.eq.f32.partialorder %v73, 0.0
    %vm173 = vcmp.eq.f32.partialorder %v74, 0.0
    %vm174 = vcmp.eq.f32.partialorder %v75, 0.0
    %vm175 = vcmp.eq.f32.partialorder %v76, 0.0
    %vm176 = vcmp.eq.f32.partialorder %v77, 0.0
    %vm177 = vcmp.eq.f32.partialorder %v78, 0.0
    %v178 = vsel %vm162, 1, 0
    %v179 = vsel %vm163, 1, 0
    %v180 = vsel %vm164, 1, 0
    %v181 = vsel %vm165, 1, 0
    %v182 = vsel %vm166, 1, 0
    %v183 = vsel %vm167, 1, 0
    %v184 = vsel %vm168, 1, 0
    %v185 = vsel %vm169, 1, 0
    %v186 = vsel %vm170, 1, 0
    %v187 = vsel %vm171, 1, 0
    %v188 = vsel %vm172, 1, 0
    %v189 = vsel %vm173, 1, 0
    %v190 = vsel %vm174, 1, 0
    %v191 = vsel %vm175, 1, 0
    %v192 = vsel %vm176, 1, 0
    %v193 = vsel %vm177, 1, 0
    %v194 = vcvt.s32.f32 %v178
    %v195 = vcvt.s32.f32 %v179
    %v196 = vcvt.s32.f32 %v180
    %v197 = vcvt.s32.f32 %v181
    %v198 = vcvt.s32.f32 %v182
    %v199 = vcvt.s32.f32 %v183
    %v200 = vcvt.s32.f32 %v184
    %v201 = vcvt.s32.f32 %v185
    %v202 = vcvt.s32.f32 %v186
    %v203 = vcvt.s32.f32 %v187
    %v204 = vcvt.s32.f32 %v188
    %v205 = vcvt.s32.f32 %v189
    %v206 = vcvt.s32.f32 %v190
    %v207 = vcvt.s32.f32 %v191
    %v208 = vcvt.s32.f32 %v192
    %v209 = vcvt.s32.f32 %v193
    %211 = vset.pattern.permute.xlu0 0
    %212 = vperm.xlu0 %211, %v80
    %v213 = vpop.permute.xlu0 %212
    %216 = vset.pattern.permute.xlu0 0
    %217 = vperm.xlu0 %216, %v81
    %v218 = vpop.permute.xlu0 %217
    %221 = vset.pattern.permute.xlu0 0
    %222 = vperm.xlu0 %221, %v82
    %v223 = vpop.permute.xlu0 %222
    %226 = vset.pattern.permute.xlu0 0
    %227 = vperm.xlu0 %226, %v83
    %v228 = vpop.permute.xlu0 %227
    %231 = vset.pattern.permute.xlu0 0
    %232 = vperm.xlu0 %231, %v84
    %v233 = vpop.permute.xlu0 %232
    %236 = vset.pattern.permute.xlu0 0
    %237 = vperm.xlu0 %236, %v85
    %v238 = vpop.permute.xlu0 %237
    %241 = vset.pattern.permute.xlu0 0
    %242 = vperm.xlu0 %241, %v86
    %v243 = vpop.permute.xlu0 %242
    %246 = vset.pattern.permute.xlu0 0
    %247 = vperm.xlu0 %246, %v87
    %v248 = vpop.permute.xlu0 %247
    %251 = vset.pattern.permute.xlu0 0
    %252 = vperm.xlu0 %251, %v88
    %v253 = vpop.permute.xlu0 %252
    %256 = vset.pattern.permute.xlu0 0
    %257 = vperm.xlu0 %256, %v89
    %v258 = vpop.permute.xlu0 %257
    %261 = vset.pattern.permute.xlu0 0
    %262 = vperm.xlu0 %261, %v90
    %v263 = vpop.permute.xlu0 %262
    %266 = vset.pattern.permute.xlu0 0
    %267 = vperm.xlu0 %266, %v91
    %v268 = vpop.permute.xlu0 %267
    %271 = vset.pattern.permute.xlu0 0
    %272 = vperm.xlu0 %271, %v92
    %v273 = vpop.permute.xlu0 %272
    %276 = vset.pattern.permute.xlu0 0
    %277 = vperm.xlu0 %276, %v93
    %v278 = vpop.permute.xlu0 %277
    %281 = vset.pattern.permute.xlu0 0
    %282 = vperm.xlu0 %281, %v94
    %v283 = vpop.permute.xlu0 %282
    %286 = vset.pattern.permute.xlu0 0
    %287 = vperm.xlu0 %286, %v95
    %v288 = vpop.permute.xlu0 %287
    %v291 = vlaneseq
    %v292 = vshrl.u32 %v291, 7
    %v293 = vsub.s32 0, %v292
    %v294 = vrot.slane %v97, %v293
    %v296 = vsub.f32 %v213, %v294
    %v297 = vsub.f32 %v218, %v294
    %v298 = vsub.f32 %v223, %v294
    %v299 = vsub.f32 %v228, %v294
    %v300 = vsub.f32 %v233, %v294
    %v301 = vsub.f32 %v238, %v294
    %v302 = vsub.f32 %v243, %v294
    %v303 = vsub.f32 %v248, %v294
    %v304 = vsub.f32 %v253, %v294
    %v305 = vsub.f32 %v258, %v294
    %v306 = vsub.f32 %v263, %v294
    %v307 = vsub.f32 %v268, %v294
    %v308 = vsub.f32 %v273, %v294
    %v309 = vsub.f32 %v278, %v294
    %v310 = vsub.f32 %v283, %v294
    %v311 = vsub.f32 %v288, %v294
    %v312 = vand.u32 2147483647, %v296
    %v313 = vand.u32 2147483647, %v297
    %v314 = vand.u32 2147483647, %v298
    %v315 = vand.u32 2147483647, %v299
    %v316 = vand.u32 2147483647, %v300
    %v317 = vand.u32 2147483647, %v301
    %v318 = vand.u32 2147483647, %v302
    %v319 = vand.u32 2147483647, %v303
    %v320 = vand.u32 2147483647, %v304
    %v321 = vand.u32 2147483647, %v305
    %v322 = vand.u32 2147483647, %v306
    %v323 = vand.u32 2147483647, %v307
    %v324 = vand.u32 2147483647, %v308
    %v325 = vand.u32 2147483647, %v309
    %v326 = vand.u32 2147483647, %v310
    %v327 = vand.u32 2147483647, %v311
    %329 = vset.pattern.permute.xlu0 0
    %330 = vperm.xlu0 %329, %v46
    %v331 = vpop.permute.xlu0 %330
    %334 = vset.pattern.permute.xlu0 0
    %335 = vperm.xlu0 %334, %v47
    %v336 = vpop.permute.xlu0 %335
    %339 = vset.pattern.permute.xlu0 0
    %340 = vperm.xlu0 %339, %v48
    %v341 = vpop.permute.xlu0 %340
    %344 = vset.pattern.permute.xlu0 0
    %345 = vperm.xlu0 %344, %v49
    %v346 = vpop.permute.xlu0 %345
    %349 = vset.pattern.permute.xlu0 0
    %350 = vperm.xlu0 %349, %v50
    %v351 = vpop.permute.xlu0 %350
    %354 = vset.pattern.permute.xlu0 0
    %355 = vperm.xlu0 %354, %v51
    %v356 = vpop.permute.xlu0 %355
    %359 = vset.pattern.permute.xlu0 0
    %360 = vperm.xlu0 %359, %v52
    %v361 = vpop.permute.xlu0 %360
    %364 = vset.pattern.permute.xlu0 0
    %365 = vperm.xlu0 %364, %v53
    %v366 = vpop.permute.xlu0 %365
    %369 = vset.pattern.permute.xlu0 0
    %370 = vperm.xlu0 %369, %v54
    %v371 = vpop.permute.xlu0 %370
    %374 = vset.pattern.permute.xlu0 0
    %375 = vperm.xlu0 %374, %v55
    %v376 = vpop.permute.xlu0 %375
    %379 = vset.pattern.permute.xlu0 0
    %380 = vperm.xlu0 %379, %v56
    %v381 = vpop.permute.xlu0 %380
    %384 = vset.pattern.permute.xlu0 0
    %385 = vperm.xlu0 %384, %v57
    %v386 = vpop.permute.xlu0 %385
    %389 = vset.pattern.permute.xlu0 0
    %390 = vperm.xlu0 %389, %v58
    %v391 = vpop.permute.xlu0 %390
    %394 = vset.pattern.permute.xlu0 0
    %395 = vperm.xlu0 %394, %v59
    %v396 = vpop.permute.xlu0 %395
    %399 = vset.pattern.permute.xlu0 0
    %400 = vperm.xlu0 %399, %v60
    %v401 = vpop.permute.xlu0 %400
    %404 = vset.pattern.permute.xlu0 0
    %405 = vperm.xlu0 %404, %v61
    %v406 = vpop.permute.xlu0 %405
    %v409 = vlaneseq
    %v410 = vshrl.u32 %v409, 7
    %v411 = vsub.s32 0, %v410
    %v412 = vrot.slane %v96, %v411
    %v414 = vsub.f32 %v331, %v412
    %v415 = vsub.f32 %v336, %v412
    %v416 = vsub.f32 %v341, %v412
    %v417 = vsub.f32 %v346, %v412
    %v418 = vsub.f32 %v351, %v412
    %v419 = vsub.f32 %v356, %v412
    %v420 = vsub.f32 %v361, %v412
    %v421 = vsub.f32 %v366, %v412
    %v422 = vsub.f32 %v371, %v412
    %v423 = vsub.f32 %v376, %v412
    %v424 = vsub.f32 %v381, %v412
    %v425 = vsub.f32 %v386, %v412
    %v426 = vsub.f32 %v391, %v412
    %v427 = vsub.f32 %v396, %v412
    %v428 = vsub.f32 %v401, %v412
    %v429 = vsub.f32 %v406, %v412
    %v430 = vand.u32 2147483647, %v414
    %v431 = vand.u32 2147483647, %v415
    %v432 = vand.u32 2147483647, %v416
    %v433 = vand.u32 2147483647, %v417
    %v434 = vand.u32 2147483647, %v418
    %v435 = vand.u32 2147483647, %v419
    %v436 = vand.u32 2147483647, %v420
    %v437 = vand.u32 2147483647, %v421
    %v438 = vand.u32 2147483647, %v422
    %v439 = vand.u32 2147483647, %v423
    %v440 = vand.u32 2147483647, %v424
    %v441 = vand.u32 2147483647, %v425
    %v442 = vand.u32 2147483647, %v426
    %v443 = vand.u32 2147483647, %v427
    %v444 = vand.u32 2147483647, %v428
    %v445 = vand.u32 2147483647, %v429
    %446 = vmatprep.subr.mxu0 0.0
    %447 = vmatpush1.msra.mxu0 %v146
    %448 = vmatprep.subr.mxu0 0.0
    %449 = vmatpush1.msra.mxu0 %v147
    %450 = vmatprep.subr.mxu0 0.0
    %451 = vmatpush1.msra.mxu0 %v148
    %452 = vmatprep.subr.mxu0 0.0
    %453 = vmatpush1.msra.mxu0 %v149
    %454 = vmatprep.subr.mxu0 0.0
    %455 = vmatpush1.msra.mxu0 %v150
    %456 = vmatprep.subr.mxu0 0.0
    %457 = vmatpush1.msra.mxu0 %v151
    %458 = vmatprep.subr.mxu0 0.0
    %459 = vmatpush1.msra.mxu0 %v152
    %460 = vmatprep.subr.mxu0 0.0
    %461 = vmatpush1.msra.mxu0 %v153
    %462 = vmatprep.subr.mxu0 0.0
    %463 = vmatpush1.msra.mxu0 %v154
    %464 = vmatprep.subr.mxu0 0.0
    %465 = vmatpush1.msra.mxu0 %v155
    %466 = vmatprep.subr.mxu0 0.0
    %467 = vmatpush1.msra.mxu0 %v156
    %468 = vmatprep.subr.mxu0 0.0
    %469 = vmatpush1.msra.mxu0 %v157
    %470 = vmatprep.subr.mxu0 0.0
    %471 = vmatpush1.msra.mxu0 %v158
    %472 = vmatprep.subr.mxu0 0.0
    %473 = vmatpush1.msra.mxu0 %v159
    %474 = vmatprep.subr.mxu0 0.0
    %475 = vmatpush1.msra.mxu0 %v160
    %476 = vmatprep.subr.mxu0 0.0
    %477 = vmatpush1.msra.mxu0 %v161
    %478 = vmatprep.subr.mxu0 0.0
    %479 = vmatpush1.msra.mxu0 0.0
    %480 = vmatprep.subr.mxu0 0.0
    %481 = vmatpush1.msra.mxu0 0.0
    %482 = vmatprep.subr.mxu0 0.0
    %483 = vmatpush1.msra.mxu0 0.0
    %484 = vmatprep.subr.mxu0 0.0
    %485 = vmatpush1.msra.mxu0 0.0
    %486 = vmatprep.subr.mxu0 0.0
    %487 = vmatpush1.msra.mxu0 0.0
    %488 = vmatprep.subr.mxu0 0.0
    %489 = vmatpush1.msra.mxu0 0.0
    %490 = vmatprep.subr.mxu0 0.0
    %491 = vmatpush1.msra.mxu0 0.0
    %492 = vmatprep.subr.mxu0 0.0
    %493 = vmatpush1.msra.mxu0 0.0
    %494 = vmatprep.subr.mxu0 0.0
    %495 = vmatpush1.msra.mxu0 0.0
    %496 = vmatprep.subr.mxu0 0.0
    %497 = vmatpush1.msra.mxu0 0.0
    %498 = vmatprep.subr.mxu0 0.0
    %499 = vmatpush1.msra.mxu0 0.0
    %500 = vmatprep.subr.mxu0 0.0
    %501 = vmatpush1.msra.mxu0 0.0
    %502 = vmatprep.subr.mxu0 0.0
    %503 = vmatpush1.msra.mxu0 0.0
    %504 = vmatprep.subr.mxu0 0.0
    %505 = vmatpush1.msra.mxu0 0.0
    %506 = vmatprep.subr.mxu0 0.0
    %507 = vmatpush1.msra.mxu0 0.0
    %508 = vmatprep.subr.mxu0 0.0
    %509 = vmatpush1.msra.mxu0 0.0
    %510 = vmatprep.mubr.f32.mxu0 0.0
    %511 = vmatmul.mubr.f32.gmra.mrb[0].mxu0 %v312
    %v512 = vpop.f32.mrb[0].mxu0
    %v513 = vadd.f32 0.0, %v512
    %v514 = vpop.f32.mrb[0].mxu0
    %515 = vmatprep.mubr.f32.mxu0 0.0
    %516 = vmatmul.mubr.f32.gmra.mrb[0].mxu0 %v313
    %v517 = vpop.f32.mrb[0].mxu0
    %v518 = vadd.f32 0.0, %v517
    %v519 = vpop.f32.mrb[0].mxu0
    %520 = vmatprep.mubr.f32.mxu0 0.0
    %521 = vmatmul.mubr.f32.gmra.mrb[0].mxu0 %v314
    %v522 = vpop.f32.mrb[0].mxu0
    %v523 = vadd.f32 0.0, %v522
    %v524 = vpop.f32.mrb[0].mxu0
    %525 = vmatprep.mubr.f32.mxu0 0.0
    %526 = vmatmul.mubr.f32.gmra.mrb[0].mxu0 %v315
    %v527 = vpop.f32.mrb[0].mxu0
    %v528 = vadd.f32 0.0, %v527
    %v529 = vpop.f32.mrb[0].mxu0
    %530 = vmatprep.mubr.f32.mxu0 0.0
    %531 = vmatmul.mubr.f32.gmra.mrb[0].mxu0 %v316
    %v532 = vpop.f32.mrb[0].mxu0
    %v533 = vadd.f32 0.0, %v532
    %v534 = vpop.f32.mrb[0].mxu0
    %535 = vmatprep.mubr.f32.mxu0 0.0
    %536 = vmatmul.mubr.f32.gmra.mrb[0].mxu0 %v317
    %v537 = vpop.f32.mrb[0].mxu0
    %v538 = vadd.f32 0.0, %v537
    %v539 = vpop.f32.mrb[0].mxu0
    %540 = vmatprep.mubr.f32.mxu0 0.0
    %541 = vmatmul.mubr.f32.gmra.mrb[0].mxu0 %v318
    %v542 = vpop.f32.mrb[0].mxu0
    %v543 = vadd.f32 0.0, %v542
    %v544 = vpop.f32.mrb[0].mxu0
    %545 = vmatprep.mubr.f32.mxu0 0.0
    %546 = vmatmul.mubr.f32.gmra.mrb[0].mxu0 %v319
    %v547 = vpop.f32.mrb[0].mxu0
    %v548 = vadd.f32 0.0, %v547
    %v549 = vpop.f32.mrb[0].mxu0
    %550 = vmatprep.mubr.f32.mxu0 0.0
    %551 = vmatmul.mubr.f32.gmra.mrb[0].mxu0 %v320
    %v552 = vpop.f32.mrb[0].mxu0
    %v553 = vadd.f32 0.0, %v552
    %v554 = vpop.f32.mrb[0].mxu0
    %555 = vmatprep.mubr.f32.mxu0 0.0
    %556 = vmatmul.mubr.f32.gmra.mrb[0].mxu0 %v321
    %v557 = vpop.f32.mrb[0].mxu0
    %v558 = vadd.f32 0.0, %v557
    %v559 = vpop.f32.mrb[0].mxu0
    %560 = vmatprep.mubr.f32.mxu0 0.0
    %561 = vmatmul.mubr.f32.gmra.mrb[0].mxu0 %v322
    %v562 = vpop.f32.mrb[0].mxu0
    %v563 = vadd.f32 0.0, %v562
    %v564 = vpop.f32.mrb[0].mxu0
    %565 = vmatprep.mubr.f32.mxu0 0.0
    %566 = vmatmul.mubr.f32.gmra.mrb[0].mxu0 %v323
    %v567 = vpop.f32.mrb[0].mxu0
    %v568 = vadd.f32 0.0, %v567
    %v569 = vpop.f32.mrb[0].mxu0
    %570 = vmatprep.mubr.f32.mxu0 0.0
    %571 = vmatmul.mubr.f32.gmra.mrb[0].mxu0 %v324
    %v572 = vpop.f32.mrb[0].mxu0
    %v573 = vadd.f32 0.0, %v572
    %v574 = vpop.f32.mrb[0].mxu0
    %575 = vmatprep.mubr.f32.mxu0 0.0
    %576 = vmatmul.mubr.f32.gmra.mrb[0].mxu0 %v325
    %v577 = vpop.f32.mrb[0].mxu0
    %v578 = vadd.f32 0.0, %v577
    %v579 = vpop.f32.mrb[0].mxu0
    %580 = vmatprep.mubr.f32.mxu0 0.0
    %581 = vmatmul.mubr.f32.gmra.mrb[0].mxu0 %v326
    %v582 = vpop.f32.mrb[0].mxu0
    %v583 = vadd.f32 0.0, %v582
    %v584 = vpop.f32.mrb[0].mxu0
    %585 = vmatprep.mubr.f32.mxu0 0.0
    %586 = vmatmul.mubr.f32.gmra.mrb[0].mxu0 %v327
    %v587 = vpop.f32.mrb[0].mxu0
    %v588 = vadd.f32 0.0, %v587
    %v589 = vpop.f32.mrb[0].mxu0
    %590 = vdwg.mxu0
    %591 = vmatprep.subr.mxu0 0.0
    %592 = vmatpush1.msra.mxu0 %v146
    %593 = vmatprep.subr.mxu0 0.0
    %594 = vmatpush1.msra.mxu0 %v147
    %595 = vmatprep.subr.mxu0 0.0
    %596 = vmatpush1.msra.mxu0 %v148
    %597 = vmatprep.subr.mxu0 0.0
    %598 = vmatpush1.msra.mxu0 %v149
    %599 = vmatprep.subr.mxu0 0.0
    %600 = vmatpush1.msra.mxu0 %v150
    %601 = vmatprep.subr.mxu0 0.0
    %602 = vmatpush1.msra.mxu0 %v151
    %603 = vmatprep.subr.mxu0 0.0
    %604 = vmatpush1.msra.mxu0 %v152
    %605 = vmatprep.subr.mxu0 0.0
    %606 = vmatpush1.msra.mxu0 %v153
    %607 = vmatprep.subr.mxu0 0.0
    %608 = vmatpush1.msra.mxu0 %v154
    %609 = vmatprep.subr.mxu0 0.0
    %610 = vmatpush1.msra.mxu0 %v155
    %611 = vmatprep.subr.mxu0 0.0
    %612 = vmatpush1.msra.mxu0 %v156
    %613 = vmatprep.subr.mxu0 0.0
    %614 = vmatpush1.msra.mxu0 %v157
    %615 = vmatprep.subr.mxu0 0.0
    %616 = vmatpush1.msra.mxu0 %v158
    %617 = vmatprep.subr.mxu0 0.0
    %618 = vmatpush1.msra.mxu0 %v159
    %619 = vmatprep.subr.mxu0 0.0
    %620 = vmatpush1.msra.mxu0 %v160
    %621 = vmatprep.subr.mxu0 0.0
    %622 = vmatpush1.msra.mxu0 %v161
    %623 = vmatprep.subr.mxu0 0.0
    %624 = vmatpush1.msra.mxu0 0.0
    %625 = vmatprep.subr.mxu0 0.0
    %626 = vmatpush1.msra.mxu0 0.0
    %627 = vmatprep.subr.mxu0 0.0
    %628 = vmatpush1.msra.mxu0 0.0
    %629 = vmatprep.subr.mxu0 0.0
    %630 = vmatpush1.msra.mxu0 0.0
    %631 = vmatprep.subr.mxu0 0.0
    %632 = vmatpush1.msra.mxu0 0.0
    %633 = vmatprep.subr.mxu0 0.0
    %634 = vmatpush1.msra.mxu0 0.0
    %635 = vmatprep.subr.mxu0 0.0
    %636 = vmatpush1.msra.mxu0 0.0
    %637 = vmatprep.subr.mxu0 0.0
    %638 = vmatpush1.msra.mxu0 0.0
    %639 = vmatprep.subr.mxu0 0.0
    %640 = vmatpush1.msra.mxu0 0.0
    %641 = vmatprep.subr.mxu0 0.0
    %642 = vmatpush1.msra.mxu0 0.0
    %643 = vmatprep.subr.mxu0 0.0
    %644 = vmatpush1.msra.mxu0 0.0
    %645 = vmatprep.subr.mxu0 0.0
    %646 = vmatpush1.msra.mxu0 0.0
    %647 = vmatprep.subr.mxu0 0.0
    %648 = vmatpush1.msra.mxu0 0.0
    %649 = vmatprep.subr.mxu0 0.0
    %650 = vmatpush1.msra.mxu0 0.0
    %651 = vmatprep.subr.mxu0 0.0
    %652 = vmatpush1.msra.mxu0 0.0
    %653 = vmatprep.subr.mxu0 0.0
    %654 = vmatpush1.msra.mxu0 0.0
    %655 = vmatprep.mubr.f32.mxu0 0.0
    %656 = vmatmul.mubr.f32.gmra.mrb[0].mxu0 %v430
    %v657 = vpop.f32.mrb[0].mxu0
    %v658 = vadd.f32 0.0, %v657
    %v659 = vpop.f32.mrb[0].mxu0
    %660 = vmatprep.mubr.f32.mxu0 0.0
    %661 = vmatmul.mubr.f32.gmra.mrb[0].mxu0 %v431
    %v662 = vpop.f32.mrb[0].mxu0
    %v663 = vadd.f32 0.0, %v662
    %v664 = vpop.f32.mrb[0].mxu0
    %665 = vmatprep.mubr.f32.mxu0 0.0
    %666 = vmatmul.mubr.f32.gmra.mrb[0].mxu0 %v432
    %v667 = vpop.f32.mrb[0].mxu0
    %v668 = vadd.f32 0.0, %v667
    %v669 = vpop.f32.mrb[0].mxu0
    %670 = vmatprep.mubr.f32.mxu0 0.0
    %671 = vmatmul.mubr.f32.gmra.mrb[0].mxu0 %v433
    %v672 = vpop.f32.mrb[0].mxu0
    %v673 = vadd.f32 0.0, %v672
    %v674 = vpop.f32.mrb[0].mxu0
    %675 = vmatprep.mubr.f32.mxu0 0.0
    %676 = vmatmul.mubr.f32.gmra.mrb[0].mxu0 %v434
    %v677 = vpop.f32.mrb[0].mxu0
    %v678 = vadd.f32 0.0, %v677
    %v679 = vpop.f32.mrb[0].mxu0
    %680 = vmatprep.mubr.f32.mxu0 0.0
    %681 = vmatmul.mubr.f32.gmra.mrb[0].mxu0 %v435
    %v682 = vpop.f32.mrb[0].mxu0
    %v683 = vadd.f32 0.0, %v682
    %v684 = vpop.f32.mrb[0].mxu0
    %685 = vmatprep.mubr.f32.mxu0 0.0
    %686 = vmatmul.mubr.f32.gmra.mrb[0].mxu0 %v436
    %v687 = vpop.f32.mrb[0].mxu0
    %v688 = vadd.f32 0.0, %v687
    %v689 = vpop.f32.mrb[0].mxu0
    %690 = vmatprep.mubr.f32.mxu0 0.0
    %691 = vmatmul.mubr.f32.gmra.mrb[0].mxu0 %v437
    %v692 = vpop.f32.mrb[0].mxu0
    %v693 = vadd.f32 0.0, %v692
    %v694 = vpop.f32.mrb[0].mxu0
    %695 = vmatprep.mubr.f32.mxu0 0.0
    %696 = vmatmul.mubr.f32.gmra.mrb[0].mxu0 %v438
    %v697 = vpop.f32.mrb[0].mxu0
    %v698 = vadd.f32 0.0, %v697
    %v699 = vpop.f32.mrb[0].mxu0
    %700 = vmatprep.mubr.f32.mxu0 0.0
    %701 = vmatmul.mubr.f32.gmra.mrb[0].mxu0 %v439
    %v702 = vpop.f32.mrb[0].mxu0
    %v703 = vadd.f32 0.0, %v702
    %v704 = vpop.f32.mrb[0].mxu0
    %705 = vmatprep.mubr.f32.mxu0 0.0
    %706 = vmatmul.mubr.f32.gmra.mrb[0].mxu0 %v440
    %v707 = vpop.f32.mrb[0].mxu0
    %v708 = vadd.f32 0.0, %v707
    %v709 = vpop.f32.mrb[0].mxu0
    %710 = vmatprep.mubr.f32.mxu0 0.0
    %711 = vmatmul.mubr.f32.gmra.mrb[0].mxu0 %v441
    %v712 = vpop.f32.mrb[0].mxu0
    %v713 = vadd.f32 0.0, %v712
    %v714 = vpop.f32.mrb[0].mxu0
    %715 = vmatprep.mubr.f32.mxu0 0.0
    %716 = vmatmul.mubr.f32.gmra.mrb[0].mxu0 %v442
    %v717 = vpop.f32.mrb[0].mxu0
    %v718 = vadd.f32 0.0, %v717
    %v719 = vpop.f32.mrb[0].mxu0
    %720 = vmatprep.mubr.f32.mxu0 0.0
    %721 = vmatmul.mubr.f32.gmra.mrb[0].mxu0 %v443
    %v722 = vpop.f32.mrb[0].mxu0
    %v723 = vadd.f32 0.0, %v722
    %v724 = vpop.f32.mrb[0].mxu0
    %725 = vmatprep.mubr.f32.mxu0 0.0
    %726 = vmatmul.mubr.f32.gmra.mrb[0].mxu0 %v444
    %v727 = vpop.f32.mrb[0].mxu0
    %v728 = vadd.f32 0.0, %v727
    %v729 = vpop.f32.mrb[0].mxu0
    %730 = vmatprep.mubr.f32.mxu0 0.0
    %731 = vmatmul.mubr.f32.gmra.mrb[0].mxu0 %v445
    %v732 = vpop.f32.mrb[0].mxu0
    %v733 = vadd.f32 0.0, %v732
    %v734 = vpop.f32.mrb[0].mxu0
    %735 = vdwg.mxu0
    %v736 = vmul.f32 %v312, %v430
    %v737 = vmul.f32 %v313, %v431
    %v738 = vmul.f32 %v314, %v432
    %v739 = vmul.f32 %v315, %v433
    %v740 = vmul.f32 %v316, %v434
    %v741 = vmul.f32 %v317, %v435
    %v742 = vmul.f32 %v318, %v436
    %v743 = vmul.f32 %v319, %v437
    %v744 = vmul.f32 %v320, %v438
    %v745 = vmul.f32 %v321, %v439
    %v746 = vmul.f32 %v322, %v440
    %v747 = vmul.f32 %v323, %v441
    %v748 = vmul.f32 %v324, %v442
    %v749 = vmul.f32 %v325, %v443
    %v750 = vmul.f32 %v326, %v444
    %v751 = vmul.f32 %v327, %v445
    %752 = vmatprep.subr.mxu0 0.0
    %753 = vmatpush1.msra.mxu0 %v146
    %754 = vmatprep.subr.mxu0 0.0
    %755 = vmatpush1.msra.mxu0 %v147
    %756 = vmatprep.subr.mxu0 0.0
    %757 = vmatpush1.msra.mxu0 %v148
    %758 = vmatprep.subr.mxu0 0.0
    %759 = vmatpush1.msra.mxu0 %v149
    %760 = vmatprep.subr.mxu0 0.0
    %761 = vmatpush1.msra.mxu0 %v150
    %762 = vmatprep.subr.mxu0 0.0
    %763 = vmatpush1.msra.mxu0 %v151
    %764 = vmatprep.subr.mxu0 0.0
    %765 = vmatpush1.msra.mxu0 %v152
    %766 = vmatprep.subr.mxu0 0.0
    %767 = vmatpush1.msra.mxu0 %v153
    %768 = vmatprep.subr.mxu0 0.0
    %769 = vmatpush1.msra.mxu0 %v154
    %770 = vmatprep.subr.mxu0 0.0
    %771 = vmatpush1.msra.mxu0 %v155
    %772 = vmatprep.subr.mxu0 0.0
    %773 = vmatpush1.msra.mxu0 %v156
    %774 = vmatprep.subr.mxu0 0.0
    %775 = vmatpush1.msra.mxu0 %v157
    %776 = vmatprep.subr.mxu0 0.0
    %777 = vmatpush1.msra.mxu0 %v158
    %778 = vmatprep.subr.mxu0 0.0
    %779 = vmatpush1.msra.mxu0 %v159
    %780 = vmatprep.subr.mxu0 0.0
    %781 = vmatpush1.msra.mxu0 %v160
    %782 = vmatprep.subr.mxu0 0.0
    %783 = vmatpush1.msra.mxu0 %v161
    %784 = vmatprep.subr.mxu0 0.0
    %785 = vmatpush1.msra.mxu0 0.0
    %786 = vmatprep.subr.mxu0 0.0
    %787 = vmatpush1.msra.mxu0 0.0
    %788 = vmatprep.subr.mxu0 0.0
    %789 = vmatpush1.msra.mxu0 0.0
    %790 = vmatprep.subr.mxu0 0.0
    %791 = vmatpush1.msra.mxu0 0.0
    %792 = vmatprep.subr.mxu0 0.0
    %793 = vmatpush1.msra.mxu0 0.0
    %794 = vmatprep.subr.mxu0 0.0
    %795 = vmatpush1.msra.mxu0 0.0
    %796 = vmatprep.subr.mxu0 0.0
    %797 = vmatpush1.msra.mxu0 0.0
    %798 = vmatprep.subr.mxu0 0.0
    %799 = vmatpush1.msra.mxu0 0.0
    %800 = vmatprep.subr.mxu0 0.0
    %801 = vmatpush1.msra.mxu0 0.0
    %802 = vmatprep.subr.mxu0 0.0
    %803 = vmatpush1.msra.mxu0 0.0
    %804 = vmatprep.subr.mxu0 0.0
    %805 = vmatpush1.msra.mxu0 0.0
    %806 = vmatprep.subr.mxu0 0.0
    %807 = vmatpush1.msra.mxu0 0.0
    %808 = vmatprep.subr.mxu0 0.0
    %809 = vmatpush1.msra.mxu0 0.0
    %810 = vmatprep.subr.mxu0 0.0
    %811 = vmatpush1.msra.mxu0 0.0
    %812 = vmatprep.subr.mxu0 0.0
    %813 = vmatpush1.msra.mxu0 0.0
    %814 = vmatprep.subr.mxu0 0.0
    %815 = vmatpush1.msra.mxu0 0.0
    %816 = vmatprep.mubr.f32.mxu0 0.0
    %817 = vmatmul.mubr.f32.gmra.mrb[0].mxu0 %v736
    %v818 = vpop.f32.mrb[0].mxu0
    %v819 = vadd.f32 0.0, %v818
    %v820 = vpop.f32.mrb[0].mxu0
    %821 = vmatprep.mubr.f32.mxu0 0.0
    %822 = vmatmul.mubr.f32.gmra.mrb[0].mxu0 %v737
    %v823 = vpop.f32.mrb[0].mxu0
    %v824 = vadd.f32 0.0, %v823
    %v825 = vpop.f32.mrb[0].mxu0
    %826 = vmatprep.mubr.f32.mxu0 0.0
    %827 = vmatmul.mubr.f32.gmra.mrb[0].mxu0 %v738
    %v828 = vpop.f32.mrb[0].mxu0
    %v829 = vadd.f32 0.0, %v828
    %v830 = vpop.f32.mrb[0].mxu0
    %831 = vmatprep.mubr.f32.mxu0 0.0
    %832 = vmatmul.mubr.f32.gmra.mrb[0].mxu0 %v739
    %v833 = vpop.f32.mrb[0].mxu0
    %v834 = vadd.f32 0.0, %v833
    %v835 = vpop.f32.mrb[0].mxu0
    %836 = vmatprep.mubr.f32.mxu0 0.0
    %837 = vmatmul.mubr.f32.gmra.mrb[0].mxu0 %v740
    %v838 = vpop.f32.mrb[0].mxu0
    %v839 = vadd.f32 0.0, %v838
    %v840 = vpop.f32.mrb[0].mxu0
    %841 = vmatprep.mubr.f32.mxu0 0.0
    %842 = vmatmul.mubr.f32.gmra.mrb[0].mxu0 %v741
    %v843 = vpop.f32.mrb[0].mxu0
    %v844 = vadd.f32 0.0, %v843
    %v845 = vpop.f32.mrb[0].mxu0
    %846 = vmatprep.mubr.f32.mxu0 0.0
    %847 = vmatmul.mubr.f32.gmra.mrb[0].mxu0 %v742
    %v848 = vpop.f32.mrb[0].mxu0
    %v849 = vadd.f32 0.0, %v848
    %v850 = vpop.f32.mrb[0].mxu0
    %851 = vmatprep.mubr.f32.mxu0 0.0
    %852 = vmatmul.mubr.f32.gmra.mrb[0].mxu0 %v743
    %v853 = vpop.f32.mrb[0].mxu0
    %v854 = vadd.f32 0.0, %v853
    %v855 = vpop.f32.mrb[0].mxu0
    %856 = vmatprep.mubr.f32.mxu0 0.0
    %857 = vmatmul.mubr.f32.gmra.mrb[0].mxu0 %v744
    %v858 = vpop.f32.mrb[0].mxu0
    %v859 = vadd.f32 0.0, %v858
    %v860 = vpop.f32.mrb[0].mxu0
    %861 = vmatprep.mubr.f32.mxu0 0.0
    %862 = vmatmul.mubr.f32.gmra.mrb[0].mxu0 %v745
    %v863 = vpop.f32.mrb[0].mxu0
    %v864 = vadd.f32 0.0, %v863
    %v865 = vpop.f32.mrb[0].mxu0
    %866 = vmatprep.mubr.f32.mxu0 0.0
    %867 = vmatmul.mubr.f32.gmra.mrb[0].mxu0 %v746
    %v868 = vpop.f32.mrb[0].mxu0
    %v869 = vadd.f32 0.0, %v868
    %v870 = vpop.f32.mrb[0].mxu0
    %871 = vmatprep.mubr.f32.mxu0 0.0
    %872 = vmatmul.mubr.f32.gmra.mrb[0].mxu0 %v747
    %v873 = vpop.f32.mrb[0].mxu0
    %v874 = vadd.f32 0.0, %v873
    %v875 = vpop.f32.mrb[0].mxu0
    %876 = vmatprep.mubr.f32.mxu0 0.0
    %877 = vmatmul.mubr.f32.gmra.mrb[0].mxu0 %v748
    %v878 = vpop.f32.mrb[0].mxu0
    %v879 = vadd.f32 0.0, %v878
    %v880 = vpop.f32.mrb[0].mxu0
    %881 = vmatprep.mubr.f32.mxu0 0.0
    %882 = vmatmul.mubr.f32.gmra.mrb[0].mxu0 %v749
    %v883 = vpop.f32.mrb[0].mxu0
    %v884 = vadd.f32 0.0, %v883
    %v885 = vpop.f32.mrb[0].mxu0
    %886 = vmatprep.mubr.f32.mxu0 0.0
    %887 = vmatmul.mubr.f32.gmra.mrb[0].mxu0 %v750
    %v888 = vpop.f32.mrb[0].mxu0
    %v889 = vadd.f32 0.0, %v888
    %v890 = vpop.f32.mrb[0].mxu0
    %891 = vmatprep.mubr.f32.mxu0 0.0
    %892 = vmatmul.mubr.f32.gmra.mrb[0].mxu0 %v751
    %v893 = vpop.f32.mrb[0].mxu0
    %v894 = vadd.f32 0.0, %v893
    %v895 = vpop.f32.mrb[0].mxu0
    %896 = vdwg.mxu0
    %v897 = vmul.f32 %v312, %v312
    %v898 = vmul.f32 %v313, %v313
    %v899 = vmul.f32 %v314, %v314
    %v900 = vmul.f32 %v315, %v315
    %v901 = vmul.f32 %v316, %v316
    %v902 = vmul.f32 %v317, %v317
    %v903 = vmul.f32 %v318, %v318
    %v904 = vmul.f32 %v319, %v319
    %v905 = vmul.f32 %v320, %v320
    %v906 = vmul.f32 %v321, %v321
    %v907 = vmul.f32 %v322, %v322
    %v908 = vmul.f32 %v323, %v323
    %v909 = vmul.f32 %v324, %v324
    %v910 = vmul.f32 %v325, %v325
    %v911 = vmul.f32 %v326, %v326
    %v912 = vmul.f32 %v327, %v327
    %913 = vmatprep.subr.mxu0 0.0
    %914 = vmatpush1.msra.mxu0 %v146
    %915 = vmatprep.subr.mxu0 0.0
    %916 = vmatpush1.msra.mxu0 %v147
    %917 = vmatprep.subr.mxu0 0.0
    %918 = vmatpush1.msra.mxu0 %v148
    %919 = vmatprep.subr.mxu0 0.0
    %920 = vmatpush1.msra.mxu0 %v149
    %921 = vmatprep.subr.mxu0 0.0
    %922 = vmatpush1.msra.mxu0 %v150
    %923 = vmatprep.subr.mxu0 0.0
    %924 = vmatpush1.msra.mxu0 %v151
    %925 = vmatprep.subr.mxu0 0.0
    %926 = vmatpush1.msra.mxu0 %v152
    %927 = vmatprep.subr.mxu0 0.0
    %928 = vmatpush1.msra.mxu0 %v153
    %929 = vmatprep.subr.mxu0 0.0
    %930 = vmatpush1.msra.mxu0 %v154
    %931 = vmatprep.subr.mxu0 0.0
    %932 = vmatpush1.msra.mxu0 %v155
    %933 = vmatprep.subr.mxu0 0.0
    %934 = vmatpush1.msra.mxu0 %v156
    %935 = vmatprep.subr.mxu0 0.0
    %936 = vmatpush1.msra.mxu0 %v157
    %937 = vmatprep.subr.mxu0 0.0
    %938 = vmatpush1.msra.mxu0 %v158
    %939 = vmatprep.subr.mxu0 0.0
    %940 = vmatpush1.msra.mxu0 %v159
    %941 = vmatprep.subr.mxu0 0.0
    %942 = vmatpush1.msra.mxu0 %v160
    %943 = vmatprep.subr.mxu0 0.0
    %944 = vmatpush1.msra.mxu0 %v161
    %945 = vmatprep.subr.mxu0 0.0
    %946 = vmatpush1.msra.mxu0 0.0
    %947 = vmatprep.subr.mxu0 0.0
    %948 = vmatpush1.msra.mxu0 0.0
    %949 = vmatprep.subr.mxu0 0.0
    %950 = vmatpush1.msra.mxu0 0.0
    %951 = vmatprep.subr.mxu0 0.0
    %952 = vmatpush1.msra.mxu0 0.0
    %953 = vmatprep.subr.mxu0 0.0
    %954 = vmatpush1.msra.mxu0 0.0
    %955 = vmatprep.subr.mxu0 0.0
    %956 = vmatpush1.msra.mxu0 0.0
    %957 = vmatprep.subr.mxu0 0.0
    %958 = vmatpush1.msra.mxu0 0.0
    %959 = vmatprep.subr.mxu0 0.0
    %960 = vmatpush1.msra.mxu0 0.0
    %961 = vmatprep.subr.mxu0 0.0
    %962 = vmatpush1.msra.mxu0 0.0
    %963 = vmatprep.subr.mxu0 0.0
    %964 = vmatpush1.msra.mxu0 0.0
    %965 = vmatprep.subr.mxu0 0.0
    %966 = vmatpush1.msra.mxu0 0.0
    %967 = vmatprep.subr.mxu0 0.0
    %968 = vmatpush1.msra.mxu0 0.0
    %969 = vmatprep.subr.mxu0 0.0
    %970 = vmatpush1.msra.mxu0 0.0
    %971 = vmatprep.subr.mxu0 0.0
    %972 = vmatpush1.msra.mxu0 0.0
    %973 = vmatprep.subr.mxu0 0.0
    %974 = vmatpush1.msra.mxu0 0.0
    %975 = vmatprep.subr.mxu0 0.0
    %976 = vmatpush1.msra.mxu0 0.0
    %977 = vmatprep.mubr.f32.mxu0 0.0
    %978 = vmatmul.mubr.f32.gmra.mrb[0].mxu0 %v897
    %v979 = vpop.f32.mrb[0].mxu0
    %v980 = vadd.f32 0.0, %v979
    %v981 = vpop.f32.mrb[0].mxu0
    %982 = vmatprep.mubr.f32.mxu0 0.0
    %983 = vmatmul.mubr.f32.gmra.mrb[0].mxu0 %v898
    %v984 = vpop.f32.mrb[0].mxu0
    %v985 = vadd.f32 0.0, %v984
    %v986 = vpop.f32.mrb[0].mxu0
    %987 = vmatprep.mubr.f32.mxu0 0.0
    %988 = vmatmul.mubr.f32.gmra.mrb[0].mxu0 %v899
    %v989 = vpop.f32.mrb[0].mxu0
    %v990 = vadd.f32 0.0, %v989
    %v991 = vpop.f32.mrb[0].mxu0
    %992 = vmatprep.mubr.f32.mxu0 0.0
    %993 = vmatmul.mubr.f32.gmra.mrb[0].mxu0 %v900
    %v994 = vpop.f32.mrb[0].mxu0
    %v995 = vadd.f32 0.0, %v994
    %v996 = vpop.f32.mrb[0].mxu0
    %997 = vmatprep.mubr.f32.mxu0 0.0
    %998 = vmatmul.mubr.f32.gmra.mrb[0].mxu0 %v901
    %v999 = vpop.f32.mrb[0].mxu0
    %v1000 = vadd.f32 0.0, %v999
    %v1001 = vpop.f32.mrb[0].mxu0
    %1002 = vmatprep.mubr.f32.mxu0 0.0
    %1003 = vmatmul.mubr.f32.gmra.mrb[0].mxu0 %v902
    %v1004 = vpop.f32.mrb[0].mxu0
    %v1005 = vadd.f32 0.0, %v1004
    %v1006 = vpop.f32.mrb[0].mxu0
    %1007 = vmatprep.mubr.f32.mxu0 0.0
    %1008 = vmatmul.mubr.f32.gmra.mrb[0].mxu0 %v903
    %v1009 = vpop.f32.mrb[0].mxu0
    %v1010 = vadd.f32 0.0, %v1009
    %v1011 = vpop.f32.mrb[0].mxu0
    %1012 = vmatprep.mubr.f32.mxu0 0.0
    %1013 = vmatmul.mubr.f32.gmra.mrb[0].mxu0 %v904
    %v1014 = vpop.f32.mrb[0].mxu0
    %v1015 = vadd.f32 0.0, %v1014
    %v1016 = vpop.f32.mrb[0].mxu0
    %1017 = vmatprep.mubr.f32.mxu0 0.0
    %1018 = vmatmul.mubr.f32.gmra.mrb[0].mxu0 %v905
    %v1019 = vpop.f32.mrb[0].mxu0
    %v1020 = vadd.f32 0.0, %v1019
    %v1021 = vpop.f32.mrb[0].mxu0
    %1022 = vmatprep.mubr.f32.mxu0 0.0
    %1023 = vmatmul.mubr.f32.gmra.mrb[0].mxu0 %v906
    %v1024 = vpop.f32.mrb[0].mxu0
    %v1025 = vadd.f32 0.0, %v1024
    %v1026 = vpop.f32.mrb[0].mxu0
    %1027 = vmatprep.mubr.f32.mxu0 0.0
    %1028 = vmatmul.mubr.f32.gmra.mrb[0].mxu0 %v907
    %v1029 = vpop.f32.mrb[0].mxu0
    %v1030 = vadd.f32 0.0, %v1029
    %v1031 = vpop.f32.mrb[0].mxu0
    %1032 = vmatprep.mubr.f32.mxu0 0.0
    %1033 = vmatmul.mubr.f32.gmra.mrb[0].mxu0 %v908
    %v1034 = vpop.f32.mrb[0].mxu0
    %v1035 = vadd.f32 0.0, %v1034
    %v1036 = vpop.f32.mrb[0].mxu0
    %1037 = vmatprep.mubr.f32.mxu0 0.0
    %1038 = vmatmul.mubr.f32.gmra.mrb[0].mxu0 %v909
    %v1039 = vpop.f32.mrb[0].mxu0
    %v1040 = vadd.f32 0.0, %v1039
    %v1041 = vpop.f32.mrb[0].mxu0
    %1042 = vmatprep.mubr.f32.mxu0 0.0
    %1043 = vmatmul.mubr.f32.gmra.mrb[0].mxu0 %v910
    %v1044 = vpop.f32.mrb[0].mxu0
    %v1045 = vadd.f32 0.0, %v1044
    %v1046 = vpop.f32.mrb[0].mxu0
    %1047 = vmatprep.mubr.f32.mxu0 0.0
    %1048 = vmatmul.mubr.f32.gmra.mrb[0].mxu0 %v911
    %v1049 = vpop.f32.mrb[0].mxu0
    %v1050 = vadd.f32 0.0, %v1049
    %v1051 = vpop.f32.mrb[0].mxu0
    %1052 = vmatprep.mubr.f32.mxu0 0.0
    %1053 = vmatmul.mubr.f32.gmra.mrb[0].mxu0 %v912
    %v1054 = vpop.f32.mrb[0].mxu0
    %v1055 = vadd.f32 0.0, %v1054
    %v1056 = vpop.f32.mrb[0].mxu0
    %1057 = vdwg.mxu0
    %v1058 = vmul.f32 %v430, %v430
    %v1059 = vmul.f32 %v431, %v431
    %v1060 = vmul.f32 %v432, %v432
    %v1061 = vmul.f32 %v433, %v433
    %v1062 = vmul.f32 %v434, %v434
    %v1063 = vmul.f32 %v435, %v435
    %v1064 = vmul.f32 %v436, %v436
    %v1065 = vmul.f32 %v437, %v437
    %v1066 = vmul.f32 %v438, %v438
    %v1067 = vmul.f32 %v439, %v439
    %v1068 = vmul.f32 %v440, %v440
    %v1069 = vmul.f32 %v441, %v441
    %v1070 = vmul.f32 %v442, %v442
    %v1071 = vmul.f32 %v443, %v443
    %v1072 = vmul.f32 %v444, %v444
    %v1073 = vmul.f32 %v445, %v445
    %1074 = vmatprep.subr.mxu0 0.0
    %1075 = vmatpush1.msra.mxu0 %v146
    %1076 = vmatprep.subr.mxu0 0.0
    %1077 = vmatpush1.msra.mxu0 %v147
    %1078 = vmatprep.subr.mxu0 0.0
    %1079 = vmatpush1.msra.mxu0 %v148
    %1080 = vmatprep.subr.mxu0 0.0
    %1081 = vmatpush1.msra.mxu0 %v149
    %1082 = vmatprep.subr.mxu0 0.0
    %1083 = vmatpush1.msra.mxu0 %v150
    %1084 = vmatprep.subr.mxu0 0.0
    %1085 = vmatpush1.msra.mxu0 %v151
    %1086 = vmatprep.subr.mxu0 0.0
    %1087 = vmatpush1.msra.mxu0 %v152
    %1088 = vmatprep.subr.mxu0 0.0
    %1089 = vmatpush1.msra.mxu0 %v153
    %1090 = vmatprep.subr.mxu0 0.0
    %1091 = vmatpush1.msra.mxu0 %v154
    %1092 = vmatprep.subr.mxu0 0.0
    %1093 = vmatpush1.msra.mxu0 %v155
    %1094 = vmatprep.subr.mxu0 0.0
    %1095 = vmatpush1.msra.mxu0 %v156
    %1096 = vmatprep.subr.mxu0 0.0
    %1097 = vmatpush1.msra.mxu0 %v157
    %1098 = vmatprep.subr.mxu0 0.0
    %1099 = vmatpush1.msra.mxu0 %v158
    %1100 = vmatprep.subr.mxu0 0.0
    %1101 = vmatpush1.msra.mxu0 %v159
    %1102 = vmatprep.subr.mxu0 0.0
    %1103 = vmatpush1.msra.mxu0 %v160
    %1104 = vmatprep.subr.mxu0 0.0
    %1105 = vmatpush1.msra.mxu0 %v161
    %1106 = vmatprep.subr.mxu0 0.0
    %1107 = vmatpush1.msra.mxu0 0.0
    %1108 = vmatprep.subr.mxu0 0.0
    %1109 = vmatpush1.msra.mxu0 0.0
    %1110 = vmatprep.subr.mxu0 0.0
    %1111 = vmatpush1.msra.mxu0 0.0
    %1112 = vmatprep.subr.mxu0 0.0
    %1113 = vmatpush1.msra.mxu0 0.0
    %1114 = vmatprep.subr.mxu0 0.0
    %1115 = vmatpush1.msra.mxu0 0.0
    %1116 = vmatprep.subr.mxu0 0.0
    %1117 = vmatpush1.msra.mxu0 0.0
    %1118 = vmatprep.subr.mxu0 0.0
    %1119 = vmatpush1.msra.mxu0 0.0
    %1120 = vmatprep.subr.mxu0 0.0
    %1121 = vmatpush1.msra.mxu0 0.0
    %1122 = vmatprep.subr.mxu0 0.0
    %1123 = vmatpush1.msra.mxu0 0.0
    %1124 = vmatprep.subr.mxu0 0.0
    %1125 = vmatpush1.msra.mxu0 0.0
    %1126 = vmatprep.subr.mxu0 0.0
    %1127 = vmatpush1.msra.mxu0 0.0
    %1128 = vmatprep.subr.mxu0 0.0
    %1129 = vmatpush1.msra.mxu0 0.0
    %1130 = vmatprep.subr.mxu0 0.0
    %1131 = vmatpush1.msra.mxu0 0.0
    %1132 = vmatprep.subr.mxu0 0.0
    %1133 = vmatpush1.msra.mxu0 0.0
    %1134 = vmatprep.subr.mxu0 0.0
    %1135 = vmatpush1.msra.mxu0 0.0
    %1136 = vmatprep.subr.mxu0 0.0
    %1137 = vmatpush1.msra.mxu0 0.0
    %1138 = vmatprep.mubr.f32.mxu0 0.0
    %1139 = vmatmul.mubr.f32.gmra.mrb[0].mxu0 %v1058
    %v1140 = vpop.f32.mrb[0].mxu0
    %v1141 = vadd.f32 0.0, %v1140
    %v1142 = vpop.f32.mrb[0].mxu0
    %1143 = vmatprep.mubr.f32.mxu0 0.0
    %1144 = vmatmul.mubr.f32.gmra.mrb[0].mxu0 %v1059
    %v1145 = vpop.f32.mrb[0].mxu0
    %v1146 = vadd.f32 0.0, %v1145
    %v1147 = vpop.f32.mrb[0].mxu0
    %1148 = vmatprep.mubr.f32.mxu0 0.0
    %1149 = vmatmul.mubr.f32.gmra.mrb[0].mxu0 %v1060
    %v1150 = vpop.f32.mrb[0].mxu0
    %v1151 = vadd.f32 0.0, %v1150
    %v1152 = vpop.f32.mrb[0].mxu0
    %1153 = vmatprep.mubr.f32.mxu0 0.0
    %1154 = vmatmul.mubr.f32.gmra.mrb[0].mxu0 %v1061
    %v1155 = vpop.f32.mrb[0].mxu0
    %v1156 = vadd.f32 0.0, %v1155
    %v1157 = vpop.f32.mrb[0].mxu0
    %1158 = vmatprep.mubr.f32.mxu0 0.0
    %1159 = vmatmul.mubr.f32.gmra.mrb[0].mxu0 %v1062
    %v1160 = vpop.f32.mrb[0].mxu0
    %v1161 = vadd.f32 0.0, %v1160
    %v1162 = vpop.f32.mrb[0].mxu0
    %1163 = vmatprep.mubr.f32.mxu0 0.0
    %1164 = vmatmul.mubr.f32.gmra.mrb[0].mxu0 %v1063
    %v1165 = vpop.f32.mrb[0].mxu0
    %v1166 = vadd.f32 0.0, %v1165
    %v1167 = vpop.f32.mrb[0].mxu0
    %1168 = vmatprep.mubr.f32.mxu0 0.0
    %1169 = vmatmul.mubr.f32.gmra.mrb[0].mxu0 %v1064
    %v1170 = vpop.f32.mrb[0].mxu0
    %v1171 = vadd.f32 0.0, %v1170
    %v1172 = vpop.f32.mrb[0].mxu0
    %1173 = vmatprep.mubr.f32.mxu0 0.0
    %1174 = vmatmul.mubr.f32.gmra.mrb[0].mxu0 %v1065
    %v1175 = vpop.f32.mrb[0].mxu0
    %v1176 = vadd.f32 0.0, %v1175
    %v1177 = vpop.f32.mrb[0].mxu0
    %1178 = vmatprep.mubr.f32.mxu0 0.0
    %1179 = vmatmul.mubr.f32.gmra.mrb[0].mxu0 %v1066
    %v1180 = vpop.f32.mrb[0].mxu0
    %v1181 = vadd.f32 0.0, %v1180
    %v1182 = vpop.f32.mrb[0].mxu0
    %1183 = vmatprep.mubr.f32.mxu0 0.0
    %1184 = vmatmul.mubr.f32.gmra.mrb[0].mxu0 %v1067
    %v1185 = vpop.f32.mrb[0].mxu0
    %v1186 = vadd.f32 0.0, %v1185
    %v1187 = vpop.f32.mrb[0].mxu0
    %1188 = vmatprep.mubr.f32.mxu0 0.0
    %1189 = vmatmul.mubr.f32.gmra.mrb[0].mxu0 %v1068
    %v1190 = vpop.f32.mrb[0].mxu0
    %v1191 = vadd.f32 0.0, %v1190
    %v1192 = vpop.f32.mrb[0].mxu0
    %1193 = vmatprep.mubr.f32.mxu0 0.0
    %1194 = vmatmul.mubr.f32.gmra.mrb[0].mxu0 %v1069
    %v1195 = vpop.f32.mrb[0].mxu0
    %v1196 = vadd.f32 0.0, %v1195
    %v1197 = vpop.f32.mrb[0].mxu0
    %1198 = vmatprep.mubr.f32.mxu0 0.0
    %1199 = vmatmul.mubr.f32.gmra.mrb[0].mxu0 %v1070
    %v1200 = vpop.f32.mrb[0].mxu0
    %v1201 = vadd.f32 0.0, %v1200
    %v1202 = vpop.f32.mrb[0].mxu0
    %1203 = vmatprep.mubr.f32.mxu0 0.0
    %1204 = vmatmul.mubr.f32.gmra.mrb[0].mxu0 %v1071
    %v1205 = vpop.f32.mrb[0].mxu0
    %v1206 = vadd.f32 0.0, %v1205
    %v1207 = vpop.f32.mrb[0].mxu0
    %1208 = vmatprep.mubr.f32.mxu0 0.0
    %1209 = vmatmul.mubr.f32.gmra.mrb[0].mxu0 %v1072
    %v1210 = vpop.f32.mrb[0].mxu0
    %v1211 = vadd.f32 0.0, %v1210
    %v1212 = vpop.f32.mrb[0].mxu0
    %1213 = vmatprep.mubr.f32.mxu0 0.0
    %1214 = vmatmul.mubr.f32.gmra.mrb[0].mxu0 %v1073
    %v1215 = vpop.f32.mrb[0].mxu0
    %v1216 = vadd.f32 0.0, %v1215
    %v1217 = vpop.f32.mrb[0].mxu0
    %1218 = vdwg.mxu0
    %s1219 = sld [smem:[#allocation2]]
    %v1220 = vmul.f32 %v194, %v513
    %v1221 = vmul.f32 %v195, %v518
    %v1222 = vmul.f32 %v196, %v523
    %v1223 = vmul.f32 %v197, %v528
    %v1224 = vmul.f32 %v198, %v533
    %v1225 = vmul.f32 %v199, %v538
    %v1226 = vmul.f32 %v200, %v543
    %v1227 = vmul.f32 %v201, %v548
    %v1228 = vmul.f32 %v202, %v553
    %v1229 = vmul.f32 %v203, %v558
    %v1230 = vmul.f32 %v204, %v563
    %v1231 = vmul.f32 %v205, %v568
    %v1232 = vmul.f32 %v206, %v573
    %v1233 = vmul.f32 %v207, %v578
    %v1234 = vmul.f32 %v208, %v583
    %v1235 = vmul.f32 %v209, %v588
    %vm1236 = vcmask 7168
    %v1237 = vsel %vm1236, %v1220, 0.0
    %v1238 = vsel %vm1236, %v1221, 0.0
    %v1239 = vadd.f32 %v1237, %v1238
    %v1240 = vsel %vm1236, %v1222, 0.0
    %v1241 = vadd.f32 %v1239, %v1240
    %v1242 = vsel %vm1236, %v1223, 0.0
    %v1243 = vadd.f32 %v1241, %v1242
    %v1244 = vsel %vm1236, %v1224, 0.0
    %v1245 = vadd.f32 %v1243, %v1244
    %v1246 = vsel %vm1236, %v1225, 0.0
    %v1247 = vadd.f32 %v1245, %v1246
    %v1248 = vsel %vm1236, %v1226, 0.0
    %v1249 = vadd.f32 %v1247, %v1248
    %v1250 = vsel %vm1236, %v1227, 0.0
    %v1251 = vadd.f32 %v1249, %v1250
    %v1252 = vsel %vm1236, %v1228, 0.0
    %v1253 = vadd.f32 %v1251, %v1252
    %v1254 = vsel %vm1236, %v1229, 0.0
    %v1255 = vadd.f32 %v1253, %v1254
    %v1256 = vsel %vm1236, %v1230, 0.0
    %v1257 = vadd.f32 %v1255, %v1256
    %v1258 = vsel %vm1236, %v1231, 0.0
    %v1259 = vadd.f32 %v1257, %v1258
    %v1260 = vsel %vm1236, %v1232, 0.0
    %v1261 = vadd.f32 %v1259, %v1260
    %v1262 = vsel %vm1236, %v1233, 0.0
    %v1263 = vadd.f32 %v1261, %v1262
    %v1264 = vsel %vm1236, %v1234, 0.0
    %v1265 = vadd.f32 %v1263, %v1264
    %v1266 = vsel %vm1236, %v1235, 0.0
    %v1267 = vadd.f32 %v1265, %v1266
    %1268 = vadd.xlane.f32.xlu0 %v1267
    %v1269 = vpop.xlane.xlu0 %1268
    %v1270 = vrot.slane %v1269, 4
    %v1271 = vadd.f32 %v1269, %v1270
    %v1272 = vrot.slane %v1271, 2
    %v1273 = vadd.f32 %v1271, %v1272
    %v1274 = vrot.slane %v1273, 1
    %v1275 = vadd.f32 %v1273, %v1274
    %s1276 = vtos %v1275
    %s1277 = sadd.f32 %s1219, %s1276
    %s1278 = scalar_lea.smem [#allocation2], 0
    %1279 = sst [smem:[%s1278]] %s1277
    %s1280 = sld [smem:[#allocation2 + $0x1]]
    %v1281 = vmul.f32 %v194, %v658
    %v1282 = vmul.f32 %v195, %v663
    %v1283 = vmul.f32 %v196, %v668
    %v1284 = vmul.f32 %v197, %v673
    %v1285 = vmul.f32 %v198, %v678
    %v1286 = vmul.f32 %v199, %v683
    %v1287 = vmul.f32 %v200, %v688
    %v1288 = vmul.f32 %v201, %v693
    %v1289 = vmul.f32 %v202, %v698
    %v1290 = vmul.f32 %v203, %v703
    %v1291 = vmul.f32 %v204, %v708
    %v1292 = vmul.f32 %v205, %v713
    %v1293 = vmul.f32 %v206, %v718
    %v1294 = vmul.f32 %v207, %v723
    %v1295 = vmul.f32 %v208, %v728
    %v1296 = vmul.f32 %v209, %v733
    %v1297 = vsel %vm1236, %v1281, 0.0
    %v1298 = vsel %vm1236, %v1282, 0.0
    %v1299 = vadd.f32 %v1297, %v1298
    %v1300 = vsel %vm1236, %v1283, 0.0
    %v1301 = vadd.f32 %v1299, %v1300
    %v1302 = vsel %vm1236, %v1284, 0.0
    %v1303 = vadd.f32 %v1301, %v1302
    %v1304 = vsel %vm1236, %v1285, 0.0
    %v1305 = vadd.f32 %v1303, %v1304
    %v1306 = vsel %vm1236, %v1286, 0.0
    %v1307 = vadd.f32 %v1305, %v1306
    %v1308 = vsel %vm1236, %v1287, 0.0
    %v1309 = vadd.f32 %v1307, %v1308
    %v1310 = vsel %vm1236, %v1288, 0.0
    %v1311 = vadd.f32 %v1309, %v1310
    %v1312 = vsel %vm1236, %v1289, 0.0
    %v1313 = vadd.f32 %v1311, %v1312
    %v1314 = vsel %vm1236, %v1290, 0.0
    %v1315 = vadd.f32 %v1313, %v1314
    %v1316 = vsel %vm1236, %v1291, 0.0
    %v1317 = vadd.f32 %v1315, %v1316
    %v1318 = vsel %vm1236, %v1292, 0.0
    %v1319 = vadd.f32 %v1317, %v1318
    %v1320 = vsel %vm1236, %v1293, 0.0
    %v1321 = vadd.f32 %v1319, %v1320
    %v1322 = vsel %vm1236, %v1294, 0.0
    %v1323 = vadd.f32 %v1321, %v1322
    %v1324 = vsel %vm1236, %v1295, 0.0
    %v1325 = vadd.f32 %v1323, %v1324
    %v1326 = vsel %vm1236, %v1296, 0.0
    %v1327 = vadd.f32 %v1325, %v1326
    %1328 = vadd.xlane.f32.xlu0 %v1327
    %v1329 = vpop.xlane.xlu0 %1328
    %v1330 = vrot.slane %v1329, 4
    %v1331 = vadd.f32 %v1329, %v1330
    %v1332 = vrot.slane %v1331, 2
    %v1333 = vadd.f32 %v1331, %v1332
    %v1334 = vrot.slane %v1333, 1
    %v1335 = vadd.f32 %v1333, %v1334
    %s1336 = vtos %v1335
    %s1337 = sadd.f32 %s1280, %s1336
    %s1338 = scalar_lea.smem [#allocation2], 1
    %1339 = sst [smem:[%s1338]] %s1337
    %s1340 = sld [smem:[#allocation2 + $0x2]]
    %v1341 = vmul.f32 %v194, %v819
    %v1342 = vmul.f32 %v195, %v824
    %v1343 = vmul.f32 %v196, %v829
    %v1344 = vmul.f32 %v197, %v834
    %v1345 = vmul.f32 %v198, %v839
    %v1346 = vmul.f32 %v199, %v844
    %v1347 = vmul.f32 %v200, %v849
    %v1348 = vmul.f32 %v201, %v854
    %v1349 = vmul.f32 %v202, %v859
    %v1350 = vmul.f32 %v203, %v864
    %v1351 = vmul.f32 %v204, %v869
    %v1352 = vmul.f32 %v205, %v874
    %v1353 = vmul.f32 %v206, %v879
    %v1354 = vmul.f32 %v207, %v884
    %v1355 = vmul.f32 %v208, %v889
    %v1356 = vmul.f32 %v209, %v894
    %v1357 = vsel %vm1236, %v1341, 0.0
    %v1358 = vsel %vm1236, %v1342, 0.0
    %v1359 = vadd.f32 %v1357, %v1358
    %v1360 = vsel %vm1236, %v1343, 0.0
    %v1361 = vadd.f32 %v1359, %v1360
    %v1362 = vsel %vm1236, %v1344, 0.0
    %v1363 = vadd.f32 %v1361, %v1362
    %v1364 = vsel %vm1236, %v1345, 0.0
    %v1365 = vadd.f32 %v1363, %v1364
    %v1366 = vsel %vm1236, %v1346, 0.0
    %v1367 = vadd.f32 %v1365, %v1366
    %v1368 = vsel %vm1236, %v1347, 0.0
    %v1369 = vadd.f32 %v1367, %v1368
    %v1370 = vsel %vm1236, %v1348, 0.0
    %v1371 = vadd.f32 %v1369, %v1370
    %v1372 = vsel %vm1236, %v1349, 0.0
    %v1373 = vadd.f32 %v1371, %v1372
    %v1374 = vsel %vm1236, %v1350, 0.0
    %v1375 = vadd.f32 %v1373, %v1374
    %v1376 = vsel %vm1236, %v1351, 0.0
    %v1377 = vadd.f32 %v1375, %v1376
    %v1378 = vsel %vm1236, %v1352, 0.0
    %v1379 = vadd.f32 %v1377, %v1378
    %v1380 = vsel %vm1236, %v1353, 0.0
    %v1381 = vadd.f32 %v1379, %v1380
    %v1382 = vsel %vm1236, %v1354, 0.0
    %v1383 = vadd.f32 %v1381, %v1382
    %v1384 = vsel %vm1236, %v1355, 0.0
    %v1385 = vadd.f32 %v1383, %v1384
    %v1386 = vsel %vm1236, %v1356, 0.0
    %v1387 = vadd.f32 %v1385, %v1386
    %1388 = vadd.xlane.f32.xlu0 %v1387
    %v1389 = vpop.xlane.xlu0 %1388
    %v1390 = vrot.slane %v1389, 4
    %v1391 = vadd.f32 %v1389, %v1390
    %v1392 = vrot.slane %v1391, 2
    %v1393 = vadd.f32 %v1391, %v1392
    %v1394 = vrot.slane %v1393, 1
    %v1395 = vadd.f32 %v1393, %v1394
    %s1396 = vtos %v1395
    %s1397 = sadd.f32 %s1340, %s1396
    %s1398 = scalar_lea.smem [#allocation2], 2
    %1399 = sst [smem:[%s1398]] %s1397
    %s1400 = sld [smem:[#allocation2 + $0x3]]
    %v1401 = vmul.f32 %v194, %v980
    %v1402 = vmul.f32 %v195, %v985
    %v1403 = vmul.f32 %v196, %v990
    %v1404 = vmul.f32 %v197, %v995
    %v1405 = vmul.f32 %v198, %v1000
    %v1406 = vmul.f32 %v199, %v1005
    %v1407 = vmul.f32 %v200, %v1010
    %v1408 = vmul.f32 %v201, %v1015
    %v1409 = vmul.f32 %v202, %v1020
    %v1410 = vmul.f32 %v203, %v1025
    %v1411 = vmul.f32 %v204, %v1030
    %v1412 = vmul.f32 %v205, %v1035
    %v1413 = vmul.f32 %v206, %v1040
    %v1414 = vmul.f32 %v207, %v1045
    %v1415 = vmul.f32 %v208, %v1050
    %v1416 = vmul.f32 %v209, %v1055
    %v1417 = vsel %vm1236, %v1401, 0.0
    %v1418 = vsel %vm1236, %v1402, 0.0
    %v1419 = vadd.f32 %v1417, %v1418
    %v1420 = vsel %vm1236, %v1403, 0.0
    %v1421 = vadd.f32 %v1419, %v1420
    %v1422 = vsel %vm1236, %v1404, 0.0
    %v1423 = vadd.f32 %v1421, %v1422
    %v1424 = vsel %vm1236, %v1405, 0.0
    %v1425 = vadd.f32 %v1423, %v1424
    %v1426 = vsel %vm1236, %v1406, 0.0
    %v1427 = vadd.f32 %v1425, %v1426
    %v1428 = vsel %vm1236, %v1407, 0.0
    %v1429 = vadd.f32 %v1427, %v1428
    %v1430 = vsel %vm1236, %v1408, 0.0
    %v1431 = vadd.f32 %v1429, %v1430
    %v1432 = vsel %vm1236, %v1409, 0.0
    %v1433 = vadd.f32 %v1431, %v1432
    %v1434 = vsel %vm1236, %v1410, 0.0
    %v1435 = vadd.f32 %v1433, %v1434
    %v1436 = vsel %vm1236, %v1411, 0.0
    %v1437 = vadd.f32 %v1435, %v1436
    %v1438 = vsel %vm1236, %v1412, 0.0
    %v1439 = vadd.f32 %v1437, %v1438
    %v1440 = vsel %vm1236, %v1413, 0.0
    %v1441 = vadd.f32 %v1439, %v1440
    %v1442 = vsel %vm1236, %v1414, 0.0
    %v1443 = vadd.f32 %v1441, %v1442
    %v1444 = vsel %vm1236, %v1415, 0.0
    %v1445 = vadd.f32 %v1443, %v1444
    %v1446 = vsel %vm1236, %v1416, 0.0
    %v1447 = vadd.f32 %v1445, %v1446
    %1448 = vadd.xlane.f32.xlu0 %v1447
    %v1449 = vpop.xlane.xlu0 %1448
    %v1450 = vrot.slane %v1449, 4
    %v1451 = vadd.f32 %v1449, %v1450
    %v1452 = vrot.slane %v1451, 2
    %v1453 = vadd.f32 %v1451, %v1452
    %v1454 = vrot.slane %v1453, 1
    %v1455 = vadd.f32 %v1453, %v1454
    %s1456 = vtos %v1455
    %s1457 = sadd.f32 %s1400, %s1456
    %s1458 = scalar_lea.smem [#allocation2], 3
    %1459 = sst [smem:[%s1458]] %s1457
    %s1460 = sld [smem:[#allocation2 + $0x4]]
    %v1461 = vmul.f32 %v194, %v1141
    %v1462 = vmul.f32 %v195, %v1146
    %v1463 = vmul.f32 %v196, %v1151
    %v1464 = vmul.f32 %v197, %v1156
    %v1465 = vmul.f32 %v198, %v1161
    %v1466 = vmul.f32 %v199, %v1166
    %v1467 = vmul.f32 %v200, %v1171
    %v1468 = vmul.f32 %v201, %v1176
    %v1469 = vmul.f32 %v202, %v1181
    %v1470 = vmul.f32 %v203, %v1186
    %v1471 = vmul.f32 %v204, %v1191
    %v1472 = vmul.f32 %v205, %v1196
    %v1473 = vmul.f32 %v206, %v1201
    %v1474 = vmul.f32 %v207, %v1206
    %v1475 = vmul.f32 %v208, %v1211
    %v1476 = vmul.f32 %v209, %v1216
    %v1477 = vsel %vm1236, %v1461, 0.0
    %v1478 = vsel %vm1236, %v1462, 0.0
    %v1479 = vadd.f32 %v1477, %v1478
    %v1480 = vsel %vm1236, %v1463, 0.0
    %v1481 = vadd.f32 %v1479, %v1480
    %v1482 = vsel %vm1236, %v1464, 0.0
    %v1483 = vadd.f32 %v1481, %v1482
    %v1484 = vsel %vm1236, %v1465, 0.0
    %v1485 = vadd.f32 %v1483, %v1484
    %v1486 = vsel %vm1236, %v1466, 0.0
    %v1487 = vadd.f32 %v1485, %v1486
    %v1488 = vsel %vm1236, %v1467, 0.0
    %v1489 = vadd.f32 %v1487, %v1488
    %v1490 = vsel %vm1236, %v1468, 0.0
    %v1491 = vadd.f32 %v1489, %v1490
    %v1492 = vsel %vm1236, %v1469, 0.0
    %v1493 = vadd.f32 %v1491, %v1492
    %v1494 = vsel %vm1236, %v1470, 0.0
    %v1495 = vadd.f32 %v1493, %v1494
    %v1496 = vsel %vm1236, %v1471, 0.0
    %v1497 = vadd.f32 %v1495, %v1496
    %v1498 = vsel %vm1236, %v1472, 0.0
    %v1499 = vadd.f32 %v1497, %v1498
    %v1500 = vsel %vm1236, %v1473, 0.0
    %v1501 = vadd.f32 %v1499, %v1500
    %v1502 = vsel %vm1236, %v1474, 0.0
    %v1503 = vadd.f32 %v1501, %v1502
    %v1504 = vsel %vm1236, %v1475, 0.0
    %v1505 = vadd.f32 %v1503, %v1504
    %v1506 = vsel %vm1236, %v1476, 0.0
    %v1507 = vadd.f32 %v1505, %v1506
    %1508 = vadd.xlane.f32.xlu0 %v1507
    %v1509 = vpop.xlane.xlu0 %1508
    %v1510 = vrot.slane %v1509, 4
    %v1511 = vadd.f32 %v1509, %v1510
    %v1512 = vrot.slane %v1511, 2
    %v1513 = vadd.f32 %v1511, %v1512
    %v1514 = vrot.slane %v1513, 1
    %v1515 = vadd.f32 %v1513, %v1514
    %s1516 = vtos %v1515
    %s1517 = sadd.f32 %s1460, %s1516
    %s1518 = scalar_lea.smem [#allocation2], 4
    %1519 = sst [smem:[%s1518]] %s1517
    %s1520 = sld [smem:[#allocation2 + $0x5]]
    %v1521 = vmul.f32 %v1220, %v658
    %v1522 = vmul.f32 %v1221, %v663
    %v1523 = vmul.f32 %v1222, %v668
    %v1524 = vmul.f32 %v1223, %v673
    %v1525 = vmul.f32 %v1224, %v678
    %v1526 = vmul.f32 %v1225, %v683
    %v1527 = vmul.f32 %v1226, %v688
    %v1528 = vmul.f32 %v1227, %v693
    %v1529 = vmul.f32 %v1228, %v698
    %v1530 = vmul.f32 %v1229, %v703
    %v1531 = vmul.f32 %v1230, %v708
    %v1532 = vmul.f32 %v1231, %v713
    %v1533 = vmul.f32 %v1232, %v718
    %v1534 = vmul.f32 %v1233, %v723
    %v1535 = vmul.f32 %v1234, %v728
    %v1536 = vmul.f32 %v1235, %v733
    %v1537 = vsel %vm1236, %v1521, 0.0
    %v1538 = vsel %vm1236, %v1522, 0.0
    %v1539 = vadd.f32 %v1537, %v1538
    %v1540 = vsel %vm1236, %v1523, 0.0
    %v1541 = vadd.f32 %v1539, %v1540
    %v1542 = vsel %vm1236, %v1524, 0.0
    %v1543 = vadd.f32 %v1541, %v1542
    %v1544 = vsel %vm1236, %v1525, 0.0
    %v1545 = vadd.f32 %v1543, %v1544
    %v1546 = vsel %vm1236, %v1526, 0.0
    %v1547 = vadd.f32 %v1545, %v1546
    %v1548 = vsel %vm1236, %v1527, 0.0
    %v1549 = vadd.f32 %v1547, %v1548
    %v1550 = vsel %vm1236, %v1528, 0.0
    %v1551 = vadd.f32 %v1549, %v1550
    %v1552 = vsel %vm1236, %v1529, 0.0
    %v1553 = vadd.f32 %v1551, %v1552
    %v1554 = vsel %vm1236, %v1530, 0.0
    %v1555 = vadd.f32 %v1553, %v1554
    %v1556 = vsel %vm1236, %v1531, 0.0
    %v1557 = vadd.f32 %v1555, %v1556
    %v1558 = vsel %vm1236, %v1532, 0.0
    %v1559 = vadd.f32 %v1557, %v1558
    %v1560 = vsel %vm1236, %v1533, 0.0
    %v1561 = vadd.f32 %v1559, %v1560
    %v1562 = vsel %vm1236, %v1534, 0.0
    %v1563 = vadd.f32 %v1561, %v1562
    %v1564 = vsel %vm1236, %v1535, 0.0
    %v1565 = vadd.f32 %v1563, %v1564
    %v1566 = vsel %vm1236, %v1536, 0.0
    %v1567 = vadd.f32 %v1565, %v1566
    %1568 = vadd.xlane.f32.xlu0 %v1567
    %v1569 = vpop.xlane.xlu0 %1568
    %v1570 = vrot.slane %v1569, 4
    %v1571 = vadd.f32 %v1569, %v1570
    %v1572 = vrot.slane %v1571, 2
    %v1573 = vadd.f32 %v1571, %v1572
    %v1574 = vrot.slane %v1573, 1
    %v1575 = vadd.f32 %v1573, %v1574
    %s1576 = vtos %v1575
    %s1577 = sadd.f32 %s1520, %s1576
    %s1578 = scalar_lea.smem [#allocation2], 5
    %1579 = sst [smem:[%s1578]] %s1577
    %s1580 = sld [smem:[#allocation2 + $0x6]]
    %v1581 = vmul.f32 %v1220, %v513
    %v1582 = vmul.f32 %v1221, %v518
    %v1583 = vmul.f32 %v1222, %v523
    %v1584 = vmul.f32 %v1223, %v528
    %v1585 = vmul.f32 %v1224, %v533
    %v1586 = vmul.f32 %v1225, %v538
    %v1587 = vmul.f32 %v1226, %v543
    %v1588 = vmul.f32 %v1227, %v548
    %v1589 = vmul.f32 %v1228, %v553
    %v1590 = vmul.f32 %v1229, %v558
    %v1591 = vmul.f32 %v1230, %v563
    %v1592 = vmul.f32 %v1231, %v568
    %v1593 = vmul.f32 %v1232, %v573
    %v1594 = vmul.f32 %v1233, %v578
    %v1595 = vmul.f32 %v1234, %v583
    %v1596 = vmul.f32 %v1235, %v588
    %v1597 = vsel %vm1236, %v1581, 0.0
    %v1598 = vsel %vm1236, %v1582, 0.0
    %v1599 = vadd.f32 %v1597, %v1598
    %v1600 = vsel %vm1236, %v1583, 0.0
    %v1601 = vadd.f32 %v1599, %v1600
    %v1602 = vsel %vm1236, %v1584, 0.0
    %v1603 = vadd.f32 %v1601, %v1602
    %v1604 = vsel %vm1236, %v1585, 0.0
    %v1605 = vadd.f32 %v1603, %v1604
    %v1606 = vsel %vm1236, %v1586, 0.0
    %v1607 = vadd.f32 %v1605, %v1606
    %v1608 = vsel %vm1236, %v1587, 0.0
    %v1609 = vadd.f32 %v1607, %v1608
    %v1610 = vsel %vm1236, %v1588, 0.0
    %v1611 = vadd.f32 %v1609, %v1610
    %v1612 = vsel %vm1236, %v1589, 0.0
    %v1613 = vadd.f32 %v1611, %v1612
    %v1614 = vsel %vm1236, %v1590, 0.0
    %v1615 = vadd.f32 %v1613, %v1614
    %v1616 = vsel %vm1236, %v1591, 0.0
    %v1617 = vadd.f32 %v1615, %v1616
    %v1618 = vsel %vm1236, %v1592, 0.0
    %v1619 = vadd.f32 %v1617, %v1618
    %v1620 = vsel %vm1236, %v1593, 0.0
    %v1621 = vadd.f32 %v1619, %v1620
    %v1622 = vsel %vm1236, %v1594, 0.0
    %v1623 = vadd.f32 %v1621, %v1622
    %v1624 = vsel %vm1236, %v1595, 0.0
    %v1625 = vadd.f32 %v1623, %v1624
    %v1626 = vsel %vm1236, %v1596, 0.0
    %v1627 = vadd.f32 %v1625, %v1626
    %1628 = vadd.xlane.f32.xlu0 %v1627
    %v1629 = vpop.xlane.xlu0 %1628
    %v1630 = vrot.slane %v1629, 4
    %v1631 = vadd.f32 %v1629, %v1630
    %v1632 = vrot.slane %v1631, 2
    %v1633 = vadd.f32 %v1631, %v1632
    %v1634 = vrot.slane %v1633, 1
    %v1635 = vadd.f32 %v1633, %v1634
    %s1636 = vtos %v1635
    %s1637 = sadd.f32 %s1580, %s1636
    %s1638 = scalar_lea.smem [#allocation2], 6
    %1639 = sst [smem:[%s1638]] %s1637
    %s1640 = sld [smem:[#allocation2 + $0x7]]
    %v1641 = vmul.f32 %v1281, %v658
    %v1642 = vmul.f32 %v1282, %v663
    %v1643 = vmul.f32 %v1283, %v668
    %v1644 = vmul.f32 %v1284, %v673
    %v1645 = vmul.f32 %v1285, %v678
    %v1646 = vmul.f32 %v1286, %v683
    %v1647 = vmul.f32 %v1287, %v688
    %v1648 = vmul.f32 %v1288, %v693
    %v1649 = vmul.f32 %v1289, %v698
    %v1650 = vmul.f32 %v1290, %v703
    %v1651 = vmul.f32 %v1291, %v708
    %v1652 = vmul.f32 %v1292, %v713
    %v1653 = vmul.f32 %v1293, %v718
    %v1654 = vmul.f32 %v1294, %v723
    %v1655 = vmul.f32 %v1295, %v728
    %v1656 = vmul.f32 %v1296, %v733
    %v1657 = vsel %vm1236, %v1641, 0.0
    %v1658 = vsel %vm1236, %v1642, 0.0
    %v1659 = vadd.f32 %v1657, %v1658
    %v1660 = vsel %vm1236, %v1643, 0.0
    %v1661 = vadd.f32 %v1659, %v1660
    %v1662 = vsel %vm1236, %v1644, 0.0
    %v1663 = vadd.f32 %v1661, %v1662
    %v1664 = vsel %vm1236, %v1645, 0.0
    %v1665 = vadd.f32 %v1663, %v1664
    %v1666 = vsel %vm1236, %v1646, 0.0
    %v1667 = vadd.f32 %v1665, %v1666
    %v1668 = vsel %vm1236, %v1647, 0.0
    %v1669 = vadd.f32 %v1667, %v1668
    %v1670 = vsel %vm1236, %v1648, 0.0
    %v1671 = vadd.f32 %v1669, %v1670
    %v1672 = vsel %vm1236, %v1649, 0.0
    %v1673 = vadd.f32 %v1671, %v1672
    %v1674 = vsel %vm1236, %v1650, 0.0
    %v1675 = vadd.f32 %v1673, %v1674
    %v1676 = vsel %vm1236, %v1651, 0.0
    %v1677 = vadd.f32 %v1675, %v1676
    %v1678 = vsel %vm1236, %v1652, 0.0
    %v1679 = vadd.f32 %v1677, %v1678
    %v1680 = vsel %vm1236, %v1653, 0.0
    %v1681 = vadd.f32 %v1679, %v1680
    %v1682 = vsel %vm1236, %v1654, 0.0
    %v1683 = vadd.f32 %v1681, %v1682
    %v1684 = vsel %vm1236, %v1655, 0.0
    %v1685 = vadd.f32 %v1683, %v1684
    %v1686 = vsel %vm1236, %v1656, 0.0
    %v1687 = vadd.f32 %v1685, %v1686
    %1688 = vadd.xlane.f32.xlu0 %v1687
    %v1689 = vpop.xlane.xlu0 %1688
    %v1690 = vrot.slane %v1689, 4
    %v1691 = vadd.f32 %v1689, %v1690
    %v1692 = vrot.slane %v1691, 2
    %v1693 = vadd.f32 %v1691, %v1692
    %v1694 = vrot.slane %v1693, 1
    %v1695 = vadd.f32 %v1693, %v1694
    %s1696 = vtos %v1695
    %s1697 = sadd.f32 %s1640, %s1696
    %s1698 = scalar_lea.smem [#allocation2], 7
    %1699 = sst [smem:[%s1698]] %s1697
    // Predicated region
    $region30: #{tpu_custom_call.1} parent=1 // pred_check
      %p1700 = pneg %p24
    $region31: #{tpu_custom_call.1} parent=1 // pred_check_branch
      %1702 = sbr.rel (%p1700) target = $region33
    $region32: #{tpu_custom_call.1} parent=1 // pred_region
      %v1703 = vld [vmem:[%s1] sm:$0x1]
      %vm1704 = vcmp.gt.f32.partialorder %v97, 120.0
      %vm1705 = vcmp.lt.f32.partialorder %v97, 130.0
      %vm1706 = vmand %vm1704, %vm1705
      %v1707 = vsel %vm1706, 1, 0
      %v1708 = vcvt.s32.f32 %v1707
      %v1709 = vmax.f32 %v96, 0.001
      %v1710 = vmin.f32 %v1709, 0.999
      %v1711 = vsub.f32 %v1703, 1.0
      %v1712 = vsub.f32 %v1710, 1.0
      %v1713 = vrcp.pop %v1712
      %v1714 = vmul.f32 %v1711, %v1713
      %v1715 = vrcp.pop %v1710
      %v1716 = vmul.f32 %v1703, %v1715
      %v1717 = vadd.f32 %v1714, %v1716
      %v1718 = vmul.f32 %v1703, 2.0
      %v1719 = vsub.f32 %v1718, 1.0
      %v1720 = vsub.f32 1.0, %v1710
      %v1721 = vlog2.pop %v1720
      %v1722 = vmul.f32 %v1721, 0.6931472
      %v1723 = vmul.f32 %v1719, %v1722
      %v1724 = vadd.f32 %v1717, %v1723
      %v1725 = vsub.f32 1.0, %v1718
      %v1726 = vlog2.pop %v1710
      %v1727 = vmul.f32 %v1726, 0.6931472
      %v1728 = vmul.f32 %v1725, %v1727
      %v1729 = vadd.f32 %v1724, %v1728
      %vm1730 = vcmask 1040384
      %v1731 = vsel %vm1730, %v1708, 0.0
      %1732 = vadd.xlane.f32.xlu0 %v1731
      %v1733 = vpop.xlane.xlu0 %1732
      %v1734 = vrot.slane %v1733, 4
      %v1735 = vadd.f32 %v1733, %v1734
      %v1736 = vrot.slane %v1735, 2
      %v1737 = vadd.f32 %v1735, %v1736
      %v1738 = vrot.slane %v1737, 1
      %v1739 = vadd.f32 %v1737, %v1738
      %s1740 = vtos %v1739
      %s1741 = smax.f32 %s1740, 1.0
      %v1742 = vmul.f32 %v1729, %v1708
      %v1743 = vsel %vm1730, %v1742, 0.0
      %1744 = vadd.xlane.f32.xlu0 %v1743
      %v1745 = vpop.xlane.xlu0 %1744
      %v1746 = vrot.slane %v1745, 4
      %v1747 = vadd.f32 %v1745, %v1746
      %v1748 = vrot.slane %v1747, 2
      %v1749 = vadd.f32 %v1747, %v1748
      %v1750 = vrot.slane %v1749, 1
      %v1751 = vadd.f32 %v1749, %v1750
      %s1752 = vtos %v1751
      %v1753 = vstv %s1741
      %v1754 = vrcp.pop %v1753
      %s1755 = vtos %v1754
      %s1756 = smul.f32 %s1752, %s1755
      %vm1757 = vcmp.eq.f32.partialorder %v1703, 0.0
      %v1758 = vsel %vm1757, 1, 0
      %v1759 = vcvt.s32.f32 %v1758
      %v1760 = vsel %vm1730, %v1759, 0.0
      %1761 = vadd.xlane.f32.xlu0 %v1760
      %v1762 = vpop.xlane.xlu0 %1761
      %v1763 = vrot.slane %v1762, 4
      %v1764 = vadd.f32 %v1762, %v1763
      %v1765 = vrot.slane %v1764, 2
      %v1766 = vadd.f32 %v1764, %v1765
      %v1767 = vrot.slane %v1766, 1
      %v1768 = vadd.f32 %v1766, %v1767
      %s1769 = vtos %v1768
      %s1770 = smax.f32 %s1769, 1.0
      %v1771 = vstv %s1770
      %v1772 = vrcp.pop %v1771
      %s1773 = vtos %v1772
      %s1774 = sld [smem:[#allocation2]]
      %s1775 = sld [smem:[#allocation2 + $0x1]]
      %s1776 = sld [smem:[#allocation2 + $0x2]]
      %s1777 = sld [smem:[#allocation2 + $0x3]]
      %s1778 = sld [smem:[#allocation2 + $0x4]]
      %s1779 = sld [smem:[#allocation2 + $0x5]]
      %s1780 = sld [smem:[#allocation2 + $0x6]]
      %s1781 = sld [smem:[#allocation2 + $0x7]]
      %s1782 = smul.f32 %s1773, 2.0
      %s1783 = smul.f32 %s1782, %s1779
      %s1784 = ssub.f32 %s1776, %s1783
      %s1785 = smul.f32 %s1774, %s1775
      %s1786 = smul.f32 %s1785, %s1773
      %s1787 = smul.f32 %s1786, %s1773
      %s1788 = sadd.f32 %s1784, %s1787
      %s1789 = smul.f32 %s1782, %s1780
      %s1790 = ssub.f32 %s1777, %s1789
      %s1791 = smul.f32 %s1774, %s1774
      %s1792 = smul.f32 %s1791, %s1773
      %s1793 = smul.f32 %s1792, %s1773
      %s1794 = sadd.f32 %s1790, %s1793
      %s1795 = smul.f32 %s1782, %s1781
      %s1796 = ssub.f32 %s1778, %s1795
      %s1797 = smul.f32 %s1775, %s1775
      %s1798 = smul.f32 %s1797, %s1773
      %s1799 = smul.f32 %s1798, %s1773
      %s1800 = sadd.f32 %s1796, %s1799
      %s1801 = smul.f32 %s1794, %s1800
      %s1802 = smax.f32 %s1801, 1e-30
      %v1803 = vstv %s1802
      %v1804 = vrsqrt.pop %v1803
      %v1805 = vmul.f32 %v1803, %v1804
      %vm1806 = vcmp.eq.f32.partialorder %v1803, inf
      %v1807 = vsel %vm1806, %v1803, %v1805
      %vm1808 = vcmp.eq.f32.partialorder %v1803, 0.0
      %v1809 = vand.u32 %v1803, 2147483648
      %v1810 = vsel %vm1808, %v1809, %v1807
      %s1811 = vtos %v1810
      %v1812 = vstv %s1811
      %v1813 = vrcp.pop %v1812
      %s1814 = vtos %v1813
      %s1815 = smul.f32 %s1788, %s1814
      %s1816 = smul.f32 %s1815, 10.0
      %s1817 = sadd.f32 %s1756, %s1816
      %s1818 = scalar_lea.smem [#allocation3], 0
      %1819 = sst [smem:[%s1818]] %s1817
    $region33: #{tpu_custom_call.1} parent=1 // pred_fallthru
      _
    // Predicated region
    $region34: #{tpu_custom_call.1} parent=1 // pred_check
      _
    $region35: #{tpu_custom_call.1} parent=1 // pred_check_branch
      %1821 = sbr.rel (0) target = $region37
    $region36: #{tpu_custom_call.1} parent=1 // pred_region
      %s1823 = ssub.s32 16, 16
      %1824 = vsyncadd [#allocation4], %s1823
      %1827 = dma.smem_to_hbm [#allocation3], 16, %s6, [#allocation4]
    $region37: #{tpu_custom_call.1} parent=1 // pred_fallthru
      _
    // Predicated region
    $region38: #{tpu_custom_call.1} parent=1 // pred_check
      _
    $region39: #{tpu_custom_call.1} parent=1 // pred_check_branch
      %1829 = sbr.rel (0) target = $region41
    $region40: #{tpu_custom_call.1} parent=1 // pred_region
      %1830 = dma.done [#allocation4], 16
    $region41: #{tpu_custom_call.1} parent=1 // pred_fallthru
      _
    %1831 = sfence
    %1832 = vsyncpa [#allocation4], 1

</llo_original>
